<compile_context>
chip_gen: v5e
topology: v5e:2x2
jax: 0.10.0
libtpu: 0.0.40
codegen_flags: <defaults>
</compile_context>

<pallas_src>
import numpy as np
import jax
import jax.numpy as jnp
from jax.experimental import pallas as pl
from jax.experimental.pallas import tpu as pltpu

# ---------------- hash-grid / MLP hyperparameters (from the module) -----------
SCALE = 0.5
L = 8                      # n_levels
FPL = 2                    # n_features_per_level
LOG2_T = 19
T = 2 ** LOG2_T            # hashmap size
N_MIN = 32                 # base resolution
B_GROWTH = float(np.exp(np.log(2048 * SCALE / N_MIN) / (L - 1)))  # per_level_scale
ENC_DIM = L * FPL          # 16
HIDDEN = 32
SLAB = L * 8 * FPL         # 128 lanes: (level, corner, feature) flattened

TN = 512                   # row tile for the Pallas grid (swept up from 128)


# ------------------------------- Pallas kernel --------------------------------
def _vis_mlp_kernel(prod_ref, w1s_ref, b1_ref, w2_ref, b2_ref, out_ref):
    # prod_ref: [TN, 128] bf16 = corner_feat * trilinear_weight, lanes laid out as
    #           (level, corner, feature).
    # w1s_ref : [128, 32] bf16 = sel @ W1 folded offline (exact, sel is 0/1 const),
    #           so the trilinear reduction and the first Linear are one MXU pass.
    h = jnp.dot(prod_ref[...], w1s_ref[...], preferred_element_type=jnp.float32)
    h = jnp.maximum(h + b1_ref[...], 0.0)                               # bias + ReLU (VPU)
    o = jnp.dot(h, w2_ref[...], preferred_element_type=jnp.float32) + b2_ref[...]
    out_ref[...] = 1.0 / (1.0 + jnp.exp(-o))                            # sigmoid (EUP exp)


def vis_net_pallas(prod, w1s, b1, w2, b2):
    n = prod.shape[0]
    n_pad = int(pl.cdiv(n, TN)) * TN
    if n_pad != n:
        prod = jnp.pad(prod, ((0, n_pad - n), (0, 0)))                  # tail tile padded with 0
    out = pl.pallas_call(
        _vis_mlp_kernel,
        out_shape=jax.ShapeDtypeStruct((n_pad, 1), jnp.float32),
        grid=(n_pad // TN,),
        in_specs=[
            pl.BlockSpec((TN, SLAB), lambda i: (i, 0)),                 # streamed bf16 slab
            pl.BlockSpec((SLAB, HIDDEN), lambda i: (0, 0)),             # fused W1 (resident)
            pl.BlockSpec((1, HIDDEN), lambda i: (0, 0)),                # b1
            pl.BlockSpec((HIDDEN, 1), lambda i: (0, 0)),                # W2
            pl.BlockSpec((1, 1), lambda i: (0, 0)),                     # b2
        ],
        out_specs=pl.BlockSpec((TN, 1), lambda i: (i, 0)),
        compiler_params=pltpu.CompilerParams(dimension_semantics=("parallel",)),
    )(prod, w1s, b1, w2, b2)
    return out[:n, 0]


# --------------------------- JAX glue: hash encoding ---------------------------
_PRIMES = jnp.array([1, 2654435761, 805459861], dtype=jnp.uint32)


def hash_grid_gather(x_unit, table):
    """x_unit: [N,3] in [0,1]; table: [L, T, FPL] (bf16).
    Returns corner features [N, L, 8, FPL] (f32) and trilinear weights [N, L, 8] (f32)."""
    feats_lv, w_lv = [], []
    for lvl in range(L):
        s = N_MIN * (B_GROWTH ** lvl) - 1.0          # tcnn-style per-level scale
        pos = x_unit * s + 0.5
        grid0 = jnp.floor(pos)
        frac = pos - grid0
        grid0 = grid0.astype(jnp.uint32)
        fs, ws = [], []
        for c in range(8):
            off = jnp.array([(c >> 0) & 1, (c >> 1) & 1, (c >> 2) & 1], dtype=jnp.uint32)
            corner = grid0 + off                                       # [N,3] uint32
            # TODO(synk): tcnn uses dense (non-hashed) indexing for coarse levels whose
            # grid fits in T; here every level uses the spatial hash.
            h = corner * _PRIMES                                       # wraps mod 2^32
            idx = (h[:, 0] ^ h[:, 1] ^ h[:, 2]) & jnp.uint32(T - 1)
            fs.append(table[lvl][idx.astype(jnp.int32)].astype(jnp.float32))  # [N, FPL]
            w = jnp.prod(jnp.where(off == 1, frac, 1.0 - frac), axis=-1)      # [N]
            ws.append(w)
        feats_lv.append(jnp.stack(fs, axis=1))                         # [N,8,FPL]
        w_lv.append(jnp.stack(ws, axis=1))                             # [N,8]
    return jnp.stack(feats_lv, axis=1), jnp.stack(w_lv, axis=1)


def vis_net_forward(x, table, w1s, b1, w2, b2):
    n = x.shape[0]
    xyz_min = -jnp.ones((1, 3), jnp.float32) * SCALE
    xyz_max = jnp.ones((1, 3), jnp.float32) * SCALE
    x_unit = jnp.clip((x - xyz_min) / (xyz_max - xyz_min), 0.0, 1.0)
    cf, cw = hash_grid_gather(x_unit, table)                           # f32
    # Single pre-multiplied bf16 slab streamed into the kernel (no [N,128] weight
    # broadcast and half the bytes of f32).
    prod = (cf * cw[..., None]).reshape(n, SLAB).astype(jnp.bfloat16)
    return vis_net_pallas(prod, w1s, b1, w2, b2)


# ----------------------------- parameter building ------------------------------
def build_params(key):
    k_t, k_w1, k_b1, k_w2, k_b2 = jax.random.split(key, 5)
    # bf16 hash table halves the XLA-side gather traffic (values are ~1e-4 scale).
    table = jax.random.uniform(k_t, (L, T, FPL), jnp.float32, -1e-4, 1e-4).astype(jnp.bfloat16)
    lim1 = 1.0 / np.sqrt(ENC_DIM)
    w1 = jax.random.uniform(k_w1, (ENC_DIM, HIDDEN), jnp.float32, -lim1, lim1)
    b1 = jax.random.uniform(k_b1, (1, HIDDEN), jnp.float32, -lim1, lim1)
    lim2 = 1.0 / np.sqrt(HIDDEN)
    w2 = jax.random.uniform(k_w2, (HIDDEN, 1), jnp.float32, -lim2, lim2)
    b2 = jax.random.uniform(k_b2, (1, 1), jnp.float32, -lim2, lim2)
    # Fold the constant 0/1 selection matrix (corner reduction) into W1 offline:
    # w1s[(lvl*8 + c)*FPL + f, :] = w1[lvl*FPL + f, :]   (exact, both are linear).
    lane_to_enc = np.array(
        [lvl * FPL + f for lvl in range(L) for c in range(8) for f in range(FPL)],
        dtype=np.int32)
    w1s = w1[jnp.asarray(lane_to_enc)].astype(jnp.bfloat16)            # [128, 32]
    return table, w1, b1, w2, b2, w1s


# ------------------------------------ main --------------------------------------
if __name__ == "__main__":
    root = jax.random.PRNGKey(0)
    k_params, k_x = jax.random.split(root)
    table, w1, b1, w2, b2, w1s = build_params(k_params)

    n_pts = 1000   # deliberately not a multiple of TN: exercises the pad/cdiv path
    x = jax.random.uniform(k_x, (n_pts, 3), jnp.float32, -SCALE, SCALE)

    vis = jax.block_until_ready(vis_net_forward(x, table, w1s, b1, w2, b2))
    assert vis.shape == (n_pts,)

    # pure-JAX f32 reference of the full forward (same bf16 table values)
    xyz_min = -jnp.ones((1, 3), jnp.float32) * SCALE
    xyz_max = jnp.ones((1, 3), jnp.float32) * SCALE
    x_unit = jnp.clip((x - xyz_min) / (xyz_max - xyz_min), 0.0, 1.0)
    cf, cw = hash_grid_gather(x_unit, table)
    enc_ref = jnp.einsum("nlcf,nlc->nlf", cf, cw).reshape(n_pts, ENC_DIM)
    h_ref = jnp.maximum(enc_ref @ w1 + b1, 0.0)
    ref = jax.nn.sigmoid(h_ref @ w2 + b2)[:, 0]
    assert bool(jnp.allclose(vis, ref, rtol=1e-3, atol=1e-4)), "mismatch vs reference"

    print("KERNEL_OK")
</pallas_src>

<mosaic_0001>
module attributes {stable_mosaic.version = 11 : i64} {
  func.func @_vis_mlp_kernel(%arg0: i32, %arg1: memref<512x128xbf16, #tpu.memory_space<vmem>>, %arg2: memref<128x32xbf16, #tpu.memory_space<vmem>>, %arg3: memref<1x32xf32, #tpu.memory_space<vmem>>, %arg4: memref<32x1xf32, #tpu.memory_space<vmem>>, %arg5: memref<1x1xf32, #tpu.memory_space<vmem>>, %arg6: memref<512x1xf32, #tpu.memory_space<vmem>>) attributes {dimension_semantics = [#tpu.dimension_semantics<parallel>], iteration_bounds = array<i64: 2>, scalar_prefetch = 0 : i64, scratch_operands = 0 : i64, tpu.core_type = #tpu.core_type<tc>, window_params = [{transform_indices = @transform_0, window_bounds = array<i64: 512, 128>}, {pipeline_mode = #tpu.pipeline_mode<synchronous>, transform_indices = @transform_1, window_bounds = array<i64: 128, 32>}, {pipeline_mode = #tpu.pipeline_mode<synchronous>, transform_indices = @transform_2, window_bounds = array<i64: 1, 32>}, {pipeline_mode = #tpu.pipeline_mode<synchronous>, transform_indices = @transform_3, window_bounds = array<i64: 32, 1>}, {pipeline_mode = #tpu.pipeline_mode<synchronous>, transform_indices = @transform_4, window_bounds = array<i64: 1, 1>}, {transform_indices = @transform_5, window_bounds = array<i64: 512, 1>}]} {
    %c0 = arith.constant 0 : index
    %c0_0 = arith.constant 0 : index
    %0 = vector.load %arg1[%c0, %c0_0] : memref<512x128xbf16, #tpu.memory_space<vmem>>, vector<512x128xbf16>
    %c0_1 = arith.constant 0 : index
    %c0_2 = arith.constant 0 : index
    %1 = vector.load %arg2[%c0_1, %c0_2] : memref<128x32xbf16, #tpu.memory_space<vmem>>, vector<128x32xbf16>
    %cst = arith.constant dense<0.000000e+00> : vector<512x32xf32>
    %2 = tpu.matmul %0, %1, %cst {dimension_numbers = #tpu.dot_dimension_numbers<[1], [0], [0], [1], [0, 0, 1, 1], [], []>} : vector<512x128xbf16>, vector<128x32xbf16>, vector<512x32xf32> -> vector<512x32xf32>
    %c0_3 = arith.constant 0 : index
    %c0_4 = arith.constant 0 : index
    %3 = vector.load %arg3[%c0_3, %c0_4] : memref<1x32xf32, #tpu.memory_space<vmem>>, vector<1x32xf32>
    %4 = vector.broadcast %3 : vector<1x32xf32> to vector<512x32xf32>
    %5 = arith.addf %2, %4 : vector<512x32xf32>
    %cst_5 = arith.constant 0.000000e+00 : f32
    %6 = vector.broadcast %cst_5 : f32 to vector<512x32xf32>
    %7 = arith.maximumf %5, %6 : vector<512x32xf32>
    %c0_6 = arith.constant 0 : index
    %c0_7 = arith.constant 0 : index
    %8 = vector.load %arg4[%c0_6, %c0_7] : memref<32x1xf32, #tpu.memory_space<vmem>>, vector<32x1xf32>
    %cst_8 = arith.constant dense<0.000000e+00> : vector<512x1xf32>
    %9 = tpu.matmul %7, %8, %cst_8 {dimension_numbers = #tpu.dot_dimension_numbers<[1], [0], [0], [1], [0, 0, 1, 1], [], []>} : vector<512x32xf32>, vector<32x1xf32>, vector<512x1xf32> -> vector<512x1xf32>
    %c0_9 = arith.constant 0 : index
    %c0_10 = arith.constant 0 : index
    %10 = vector.load %arg5[%c0_9, %c0_10] : memref<1x1xf32, #tpu.memory_space<vmem>>, vector<1x1xf32>
    %11 = vector.broadcast %10 : vector<1x1xf32> to vector<512x1xf32>
    %12 = arith.addf %9, %11 : vector<512x1xf32>
    %cst_11 = arith.constant 0.000000e+00 : f32
    %13 = vector.broadcast %cst_11 : f32 to vector<512x1xf32>
    %14 = arith.subf %13, %12 : vector<512x1xf32>
    %15 = math.exp %14 : vector<512x1xf32>
    %cst_12 = arith.constant 1.000000e+00 : f32
    %16 = vector.broadcast %cst_12 : f32 to vector<512x1xf32>
    %17 = arith.addf %16, %15 : vector<512x1xf32>
    %cst_13 = arith.constant 1.000000e+00 : f32
    %18 = vector.broadcast %cst_13 : f32 to vector<512x1xf32>
    %19 = arith.divf %18, %17 : vector<512x1xf32>
    %c0_14 = arith.constant 0 : index
    %c0_15 = arith.constant 0 : index
    %20 = vector.load %arg6[%c0_14, %c0_15] : memref<512x1xf32, #tpu.memory_space<vmem>>, vector<512x1xf32>
    tpu.vector_store %arg6[%c0_14, %c0_15], %19 {strides = array<i32>} : memref<512x1xf32, #tpu.memory_space<vmem>>, vector<512x1xf32>,
    return
  }
  func.func @transform_0(%arg0: i32) -> (i32, i32) {
    %c0_i32 = arith.constant 0 : i32
    %c0_i32_0 = arith.constant 0 : i32
    return %arg0, %c0_i32 : i32, i32
  }
  func.func @transform_1(%arg0: i32) -> (i32, i32) {
    %c0_i32 = arith.constant 0 : i32
    %c0_i32_0 = arith.constant 0 : i32
    %c0_i32_1 = arith.constant 0 : i32
    return %c0_i32, %c0_i32_0 : i32, i32
  }
  func.func @transform_2(%arg0: i32) -> (i32, i32) {
    %c0_i32 = arith.constant 0 : i32
    %c0_i32_0 = arith.constant 0 : i32
    %c0_i32_1 = arith.constant 0 : i32
    return %c0_i32, %c0_i32_0 : i32, i32
  }
  func.func @transform_3(%arg0: i32) -> (i32, i32) {
    %c0_i32 = arith.constant 0 : i32
    %c0_i32_0 = arith.constant 0 : i32
    %c0_i32_1 = arith.constant 0 : i32
    return %c0_i32, %c0_i32_0 : i32, i32
  }
  func.func @transform_4(%arg0: i32) -> (i32, i32) {
    %c0_i32 = arith.constant 0 : i32
    %c0_i32_0 = arith.constant 0 : i32
    %c0_i32_1 = arith.constant 0 : i32
    return %c0_i32, %c0_i32_0 : i32, i32
  }
  func.func @transform_5(%arg0: i32) -> (i32, i32) {
    %c0_i32 = arith.constant 0 : i32
    %c0_i32_0 = arith.constant 0 : i32
    return %arg0, %c0_i32 : i32, i32
  }
}

</mosaic_0001>

<llo_original>
// kernel: tpu_custom_call.1
$region0: #{tpu_custom_call.1}
  #allocation0 [shape = 'u32[]', space=smem, size = 0x4, offset = 0x4, fixed_abs, tag = 'smem constant byte address 0x4 - core index']
  #allocation1 [shape = 'u32[72,128]{1,0:T(1,128)}', space=vmem, size = 0x9000, scoped, tag = 'internal scratch']
  #allocation2 [shape = 'f32[1,1]{1,0:T(1,128)S(1)}', space=vmem, size = 0x200, scoped, tag = 'scoped memory for tpu_custom_call.1']
  %s0 = inlined_call_operand.hbm [shape: bf16[1024,128], index: 0, kind: input, shape index: {}]
  %s1 = inlined_call_operand.vmem [shape: bf16[128,32], index: 1, kind: input, shape index: {}]
  %s2 = inlined_call_operand.vmem [shape: f32[1,32], index: 2, kind: input, shape index: {}]
  %s3 = inlined_call_operand.vmem [shape: f32[32,1], index: 3, kind: input, shape index: {}]
  %s4 = inlined_call_operand.<no memory space> [shape: f32[1,1], index: 4, kind: input, shape index: {}]
  %s5 = inlined_call_operand.vmem [shape: f32[1024,1], index: 5, kind: output, shape index: {}]
  %s6 = sld [smem:[#allocation0]]
  $region57: #{tpu_custom_call.1} parent=0
    _
  %s8 = ssub.s32 1, %s6
  %s9 = scalar_select 0, %s8, %s6
  %v10 = vstv %s4
  %11 = vst [vmem:[#allocation2] sm:$0x1] %v10
  $region1: #{tpu_custom_call.1} parent=0
    #allocation3 [shape = 'u8[262144]{0}', space=vmem, size = 0x40000, scoped, tag = 'input window, operand 0']
    #allocation4 [shape = 's32[2]{0}', space=sflag, size = 0x8, scoped, tag = 'scoped memory for tpu_custom_call.1']
    %12 = vsyncpa [#allocation4], 0
    %s13 = scalar_lea.sflag [#allocation4], 1
    %14 = vsyncpa %s13, 0
    loop: start=0, step=1, limit=4
    $region2: #{tpu_custom_call.1} parent=1 // loop_pre_header
      _
    $region3: #{tpu_custom_call.1} parent=1 // loop_header
      %s16 = sphi 0, %s20
      %p17 = scmp.ge.s32.totalorder %s16, 4
      %s26 = sphi 0, %s28
      %s29 = sphi 0, %s26
      %s30 = sphi 0, %s29
      %s46 = sphi 0, %s30
      %s50 = sphi 0, %s50
      %s52 = sphi 0, %s50
      %s53 = sphi 0, %s52
      %s67 = sphi 0, %s53
      %s71 = sphi 0, %s71
      %s73 = sphi 0, %s71
      %s74 = sphi 0, %s73
      %s88 = sphi 0, %s74
      %s92 = sphi 0, %s92
      %s94 = sphi 0, %s92
      %s95 = sphi 0, %s94
      %s109 = sphi 0, %s95
      %s113 = sphi 0, %s113
      %s115 = sphi 0, %s113
      %s116 = sphi 0, %s115
      %s130 = sphi 0, %s116
      %s136 = sphi 0, %s138
      %s139 = sphi 0, %s136
      %s140 = sphi 0, %s139
      %s156 = sphi 0, %s140
    $region4: #{tpu_custom_call.1} parent=1 // loop_header_branch
      %19 = sbr.rel (%p17) target = $region8
    $region5: #{tpu_custom_call.1} parent=1 // loop_body
      %s21 = ssub.s32 %s16, 1
      %s22 = ssub.s32 %s16, 2
      %s23 = sadd.s32 %s16, 1
      %s24 = ssub.s32 %s16, %s23
      %p25 = scmp.eq.s32.totalorder %s24, 0
      %s27 = sadd.s32 %s26, 1
      %s28 = scalar_select %p25, %s26, %s27
      %p31 = pneg %p25
      %p32 = scmp.eq.s32.totalorder %s16, 1
      %p33 = por %p31, %p32
      %p34 = scmp.ne.s32.totalorder %s26, %s29
      %p35 = scmp.eq.s32.totalorder %s16, 0
      %p36 = por %p34, %p35
      %p37 = scmp.ne.s32.totalorder %s26, %s29
      %p38 = scmp.eq.s32.totalorder %s21, 1
      %p39 = por %p37, %p38
      %p40 = scmp.ne.s32.totalorder %s29, %s30
      %p41 = scmp.eq.s32.totalorder %s21, 0
      %p42 = por %p40, %p41
      %p43 = scmp.ne.s32.totalorder %s29, %s30
      %p44 = scmp.eq.s32.totalorder %s22, 1
      %p45 = por %p43, %p44
      %p47 = scmp.ne.s32.totalorder %s30, %s46
      %p48 = scmp.eq.s32.totalorder %s22, 0
      %p49 = por %p47, %p48
      %s51 = sadd.s32 %s50, 1
      %p54 = scmp.eq.s32.totalorder %s16, 1
      %p55 = scmp.ne.s32.totalorder %s50, %s52
      %p56 = scmp.eq.s32.totalorder %s16, 0
      %p57 = por %p55, %p56
      %p58 = scmp.ne.s32.totalorder %s50, %s52
      %p59 = scmp.eq.s32.totalorder %s21, 1
      %p60 = por %p58, %p59
      %p61 = scmp.ne.s32.totalorder %s52, %s53
      %p62 = scmp.eq.s32.totalorder %s21, 0
      %p63 = por %p61, %p62
      %p64 = scmp.ne.s32.totalorder %s52, %s53
      %p65 = scmp.eq.s32.totalorder %s22, 1
      %p66 = por %p64, %p65
      %p68 = scmp.ne.s32.totalorder %s53, %s67
      %p69 = scmp.eq.s32.totalorder %s22, 0
      %p70 = por %p68, %p69
      %s72 = sadd.s32 %s71, 1
      %p75 = scmp.eq.s32.totalorder %s16, 1
      %p76 = scmp.ne.s32.totalorder %s71, %s73
      %p77 = scmp.eq.s32.totalorder %s16, 0
      %p78 = por %p76, %p77
      %p79 = scmp.ne.s32.totalorder %s71, %s73
      %p80 = scmp.eq.s32.totalorder %s21, 1
      %p81 = por %p79, %p80
      %p82 = scmp.ne.s32.totalorder %s73, %s74
      %p83 = scmp.eq.s32.totalorder %s21, 0
      %p84 = por %p82, %p83
      %p85 = scmp.ne.s32.totalorder %s73, %s74
      %p86 = scmp.eq.s32.totalorder %s22, 1
      %p87 = por %p85, %p86
      %p89 = scmp.ne.s32.totalorder %s74, %s88
      %p90 = scmp.eq.s32.totalorder %s22, 0
      %p91 = por %p89, %p90
      %s93 = sadd.s32 %s92, 1
      %p96 = scmp.eq.s32.totalorder %s16, 1
      %p97 = scmp.ne.s32.totalorder %s92, %s94
      %p98 = scmp.eq.s32.totalorder %s16, 0
      %p99 = por %p97, %p98
      %p100 = scmp.ne.s32.totalorder %s92, %s94
      %p101 = scmp.eq.s32.totalorder %s21, 1
      %p102 = por %p100, %p101
      %p103 = scmp.ne.s32.totalorder %s94, %s95
      %p104 = scmp.eq.s32.totalorder %s21, 0
      %p105 = por %p103, %p104
      %p106 = scmp.ne.s32.totalorder %s94, %s95
      %p107 = scmp.eq.s32.totalorder %s22, 1
      %p108 = por %p106, %p107
      %p110 = scmp.ne.s32.totalorder %s95, %s109
      %p111 = scmp.eq.s32.totalorder %s22, 0
      %p112 = por %p110, %p111
      %s114 = sadd.s32 %s113, 1
      %p117 = scmp.eq.s32.totalorder %s16, 1
      %p118 = scmp.ne.s32.totalorder %s113, %s115
      %p119 = scmp.eq.s32.totalorder %s16, 0
      %p120 = por %p118, %p119
      %p121 = scmp.ne.s32.totalorder %s113, %s115
      %p122 = scmp.eq.s32.totalorder %s21, 1
      %p123 = por %p121, %p122
      %p124 = scmp.ne.s32.totalorder %s115, %s116
      %p125 = scmp.eq.s32.totalorder %s21, 0
      %p126 = por %p124, %p125
      %p127 = scmp.ne.s32.totalorder %s115, %s116
      %p128 = scmp.eq.s32.totalorder %s22, 1
      %p129 = por %p127, %p128
      %p131 = scmp.ne.s32.totalorder %s116, %s130
      %p132 = scmp.eq.s32.totalorder %s22, 0
      %p133 = por %p131, %p132
      %s134 = ssub.s32 %s16, %s23
      %p135 = scmp.eq.s32.totalorder %s134, 0
      %s137 = sadd.s32 %s136, 1
      %s138 = scalar_select %p135, %s136, %s137
      %p141 = pneg %p135
      %p142 = scmp.eq.s32.totalorder %s16, 1
      %p143 = por %p141, %p142
      %p144 = scmp.ne.s32.totalorder %s136, %s139
      %p145 = scmp.eq.s32.totalorder %s16, 0
      %p146 = por %p144, %p145
      %p147 = scmp.ne.s32.totalorder %s136, %s139
      %p148 = scmp.eq.s32.totalorder %s21, 1
      %p149 = por %p147, %p148
      %p150 = scmp.ne.s32.totalorder %s139, %s140
      %p151 = scmp.eq.s32.totalorder %s21, 0
      %p152 = por %p150, %p151
      %p153 = scmp.ne.s32.totalorder %s139, %s140
      %p154 = scmp.eq.s32.totalorder %s22, 1
      %p155 = por %p153, %p154
      %p157 = scmp.ne.s32.totalorder %s140, %s156
      %p158 = scmp.eq.s32.totalorder %s22, 0
      %p159 = por %p157, %p158
      %p160 = scmp.le.s32.totalorder 1, %s16
      %p161 = scmp.lt.s32.totalorder %s16, 3
      %p162 = pnand %p160, %p161
      %p163 = pneg %p162
      // Predicated region
      $region9: #{tpu_custom_call.1} parent=5 // pred_check
        _
      $region10: #{tpu_custom_call.1} parent=5 // pred_check_branch
        %165 = sbr.rel (%p162) target = $region12
      $region11: #{tpu_custom_call.1} parent=5 // pred_region
        %s166 = ssub.s32 %s16, 1
        // Predicated region
        $region13: #{tpu_custom_call.1} parent=11 // pred_check
          %p167 = pneg %p63
        $region14: #{tpu_custom_call.1} parent=11 // pred_check_branch
          %169 = sbr.rel (%p167) target = $region16
        $region15: #{tpu_custom_call.1} parent=11 // pred_region
          _
        $region16: #{tpu_custom_call.1} parent=11 // pred_fallthru
          _
        // Predicated region
        $region17: #{tpu_custom_call.1} parent=11 // pred_check
          %p170 = pneg %p84
        $region18: #{tpu_custom_call.1} parent=11 // pred_check_branch
          %172 = sbr.rel (%p170) target = $region20
        $region19: #{tpu_custom_call.1} parent=11 // pred_region
          _
        $region20: #{tpu_custom_call.1} parent=11 // pred_fallthru
          _
        // Predicated region
        $region21: #{tpu_custom_call.1} parent=11 // pred_check
          %p173 = pneg %p105
        $region22: #{tpu_custom_call.1} parent=11 // pred_check_branch
          %175 = sbr.rel (%p173) target = $region24
        $region23: #{tpu_custom_call.1} parent=11 // pred_region
          _
        $region24: #{tpu_custom_call.1} parent=11 // pred_fallthru
          _
        // Predicated region
        $region25: #{tpu_custom_call.1} parent=11 // pred_check
          %p176 = pneg %p126
        $region26: #{tpu_custom_call.1} parent=11 // pred_check_branch
          %178 = sbr.rel (%p176) target = $region28
        $region27: #{tpu_custom_call.1} parent=11 // pred_region
          _
        $region28: #{tpu_custom_call.1} parent=11 // pred_fallthru
          _
      $region12: #{tpu_custom_call.1} parent=5 // pred_fallthru
        _
      %p179 = scmp.lt.s32.totalorder %s16, 2
      // Predicated region
      $region29: #{tpu_custom_call.1} parent=5 // pred_check
        %p180 = pneg %p179
      $region30: #{tpu_custom_call.1} parent=5 // pred_check_branch
        %182 = sbr.rel (%p180) target = $region32
      $region31: #{tpu_custom_call.1} parent=5 // pred_region
        // Predicated region
        $region33: #{tpu_custom_call.1} parent=31 // pred_check
          %p183 = pneg %p36
        $region34: #{tpu_custom_call.1} parent=31 // pred_check_branch
          %185 = sbr.rel (%p183) target = $region36
        $region35: #{tpu_custom_call.1} parent=31 // pred_region
          %s186 = sand.u32 %s26, 1
          %s187 = scalar_lea.sflag [#allocation4], %s186
          %s188 = sand.u32 %s26, 1
          %s189 = smul.addr %s188, 256
          %s190 = scalar_lea.vmem [#allocation3], %s189
          %s191 = smul.u32 64, %s16
          %193 = vsyncadd %s187, 0
          %s194 = smul.addr %s191, 4
          %s195 = scalar_lea.hbm %s0, %s194
          %s196 = sshll.u32 %s195, 4
          %s197 = int_to_ptr.hbm [resolvable:$true] %s196
          %s198 = sshll.u32 %s190, 4
          %s199 = int_to_ptr.vmem [resolvable:$true] %s198
          %204 = dma.hbm_to_vmem [thread:$0]  %s197, 4096, %s199, %s187, 64, 64, 4
        $region36: #{tpu_custom_call.1} parent=31 // pred_fallthru
          _
      $region32: #{tpu_custom_call.1} parent=5 // pred_fallthru
        _
      %p205 = scmp.le.s32.totalorder 1, %s16
      %p206 = scmp.lt.s32.totalorder %s16, 3
      %p207 = pnand %p205, %p206
      %p208 = pneg %p207
      // Predicated region
      $region37: #{tpu_custom_call.1} parent=5 // pred_check
        _
      $region38: #{tpu_custom_call.1} parent=5 // pred_check_branch
        %210 = sbr.rel (%p207) target = $region40
      $region39: #{tpu_custom_call.1} parent=5 // pred_region
        %s211 = ssub.s32 %s16, 1
        %s212 = sand.u32 %s29, 1
        %s213 = scalar_lea.sflag [#allocation4], %s212
        %s214 = sand.u32 %s29, 1
        %s215 = smul.addr %s214, 256
        %s216 = scalar_lea.vmem [#allocation3], %s215
        // Predicated region
        $region41: #{tpu_custom_call.1} parent=39 // pred_check
          %p217 = pneg %p42
        $region42: #{tpu_custom_call.1} parent=39 // pred_check_branch
          %219 = sbr.rel (%p217) target = $region44
        $region43: #{tpu_custom_call.1} parent=39 // pred_region
          %221 = dma.done %s213, 4096
        $region44: #{tpu_custom_call.1} parent=39 // pred_fallthru
          _
        %s222 = sand.u32 %s29, 1
        %s223 = scalar_lea.sflag [#allocation4], %s222
        %s224 = sand.u32 %s29, 1
        %s225 = smul.addr %s224, 256
        %s226 = scalar_lea.vmem [#allocation3], %s225
        %p227 = pneg %p42
        %p228 = pneg %p39
        %p229 = pneg %p63
        %p230 = pneg %p60
        %p231 = pneg %p84
        %p232 = pneg %p81
        %p233 = pneg %p105
        %p234 = pneg %p102
        %p235 = pneg %p126
        %p236 = pneg %p123
        %p237 = pneg %p152
        %p238 = pneg %p149
        %s239 = smul.u32 64, %s21
        %p240 = scmp.lt.s32.totalorder %s239, 127
        %s241 = scalar_select %p240, %s239, 127
        %s242 = smul.addr %s241, 8
        %s243 = scalar_lea.vmem %s5, %s242
        %s244 = smul.u32 64, %s21
        %s245 = smul.u32 64, %s21
        %p246 = scmp.lt.s32.totalorder %s245, 127
        %s247 = scalar_select %p246, %s245, 127
        %s248 = smul.addr %s247, 8
        %s249 = scalar_lea.vmem %s5, %s248
        %s250 = smul.u32 64, %s21
        %v251 = vld [vmem:[%s216] sm:$0xf]
        %v252 = vld [vmem:[%s216 + $0x4] sm:$0xf]
        %v253 = vld [vmem:[%s216 + $0x8] sm:$0xf]
        %v254 = vld [vmem:[%s216 + $0xc] sm:$0xf]
        %v255 = vld [vmem:[%s216 + $0x10] sm:$0xf]
        %v256 = vld [vmem:[%s216 + $0x14] sm:$0xf]
        %v257 = vld [vmem:[%s216 + $0x18] sm:$0xf]
        %v258 = vld [vmem:[%s216 + $0x1c] sm:$0xf]
        %v259 = vld [vmem:[%s216 + $0x20] sm:$0xf]
        %v260 = vld [vmem:[%s216 + $0x24] sm:$0xf]
        %v261 = vld [vmem:[%s216 + $0x28] sm:$0xf]
        %v262 = vld [vmem:[%s216 + $0x2c] sm:$0xf]
        %v263 = vld [vmem:[%s216 + $0x30] sm:$0xf]
        %v264 = vld [vmem:[%s216 + $0x34] sm:$0xf]
        %v265 = vld [vmem:[%s216 + $0x38] sm:$0xf]
        %v266 = vld [vmem:[%s216 + $0x3c] sm:$0xf]
        %v267 = vld [vmem:[%s216 + $0x40] sm:$0xf]
        %v268 = vld [vmem:[%s216 + $0x44] sm:$0xf]
        %v269 = vld [vmem:[%s216 + $0x48] sm:$0xf]
        %v270 = vld [vmem:[%s216 + $0x4c] sm:$0xf]
        %v271 = vld [vmem:[%s216 + $0x50] sm:$0xf]
        %v272 = vld [vmem:[%s216 + $0x54] sm:$0xf]
        %v273 = vld [vmem:[%s216 + $0x58] sm:$0xf]
        %v274 = vld [vmem:[%s216 + $0x5c] sm:$0xf]
        %v275 = vld [vmem:[%s216 + $0x60] sm:$0xf]
        %v276 = vld [vmem:[%s216 + $0x64] sm:$0xf]
        %v277 = vld [vmem:[%s216 + $0x68] sm:$0xf]
        %v278 = vld [vmem:[%s216 + $0x6c] sm:$0xf]
        %v279 = vld [vmem:[%s216 + $0x70] sm:$0xf]
        %v280 = vld [vmem:[%s216 + $0x74] sm:$0xf]
        %v281 = vld [vmem:[%s216 + $0x78] sm:$0xf]
        %v282 = vld [vmem:[%s216 + $0x7c] sm:$0xf]
        %v283 = vld [vmem:[%s216 + $0x80] sm:$0xf]
        %v284 = vld [vmem:[%s216 + $0x84] sm:$0xf]
        %v285 = vld [vmem:[%s216 + $0x88] sm:$0xf]
        %v286 = vld [vmem:[%s216 + $0x8c] sm:$0xf]
        %v287 = vld [vmem:[%s216 + $0x90] sm:$0xf]
        %v288 = vld [vmem:[%s216 + $0x94] sm:$0xf]
        %v289 = vld [vmem:[%s216 + $0x98] sm:$0xf]
        %v290 = vld [vmem:[%s216 + $0x9c] sm:$0xf]
        %v291 = vld [vmem:[%s216 + $0xa0] sm:$0xf]
        %v292 = vld [vmem:[%s216 + $0xa4] sm:$0xf]
        %v293 = vld [vmem:[%s216 + $0xa8] sm:$0xf]
        %v294 = vld [vmem:[%s216 + $0xac] sm:$0xf]
        %v295 = vld [vmem:[%s216 + $0xb0] sm:$0xf]
        %v296 = vld [vmem:[%s216 + $0xb4] sm:$0xf]
        %v297 = vld [vmem:[%s216 + $0xb8] sm:$0xf]
        %v298 = vld [vmem:[%s216 + $0xbc] sm:$0xf]
        %v299 = vld [vmem:[%s216 + $0xc0] sm:$0xf]
        %v300 = vld [vmem:[%s216 + $0xc4] sm:$0xf]
        %v301 = vld [vmem:[%s216 + $0xc8] sm:$0xf]
        %v302 = vld [vmem:[%s216 + $0xcc] sm:$0xf]
        %v303 = vld [vmem:[%s216 + $0xd0] sm:$0xf]
        %v304 = vld [vmem:[%s216 + $0xd4] sm:$0xf]
        %v305 = vld [vmem:[%s216 + $0xd8] sm:$0xf]
        %v306 = vld [vmem:[%s216 + $0xdc] sm:$0xf]
        %v307 = vld [vmem:[%s216 + $0xe0] sm:$0xf]
        %v308 = vld [vmem:[%s216 + $0xe4] sm:$0xf]
        %v309 = vld [vmem:[%s216 + $0xe8] sm:$0xf]
        %v310 = vld [vmem:[%s216 + $0xec] sm:$0xf]
        %v311 = vld [vmem:[%s216 + $0xf0] sm:$0xf]
        %v312 = vld [vmem:[%s216 + $0xf4] sm:$0xf]
        %v313 = vld [vmem:[%s216 + $0xf8] sm:$0xf]
        %v314 = vld [vmem:[%s216 + $0xfc] sm:$0xf]
        %v315 = vld [vmem:[%s1] sm:$0xf]
        %v316 = vld [vmem:[%s1 + $0x4] sm:$0xf]
        %v317 = vld [vmem:[%s1 + $0x8] sm:$0xf]
        %v318 = vld [vmem:[%s1 + $0xc] sm:$0xf]
        %v319 = vld [vmem:[%s1 + $0x10] sm:$0xf]
        %v320 = vld [vmem:[%s1 + $0x14] sm:$0xf]
        %v321 = vld [vmem:[%s1 + $0x18] sm:$0xf]
        %v322 = vld [vmem:[%s1 + $0x1c] sm:$0xf]
        %v323 = vld [vmem:[%s1 + $0x20] sm:$0xf]
        %v324 = vld [vmem:[%s1 + $0x24] sm:$0xf]
        %v325 = vld [vmem:[%s1 + $0x28] sm:$0xf]
        %v326 = vld [vmem:[%s1 + $0x2c] sm:$0xf]
        %v327 = vld [vmem:[%s1 + $0x30] sm:$0xf]
        %v328 = vld [vmem:[%s1 + $0x34] sm:$0xf]
        %v329 = vld [vmem:[%s1 + $0x38] sm:$0xf]
        %v330 = vld [vmem:[%s1 + $0x3c] sm:$0xf]
        %v331 = vld [vmem:[%s2] sm:$0x1]
        %v333 = vperm.slane %v331, 0
        %v399 = vunpack.c.l.b16 %v251
        %v400 = vunpack.c.l.b16 %v252
        %v401 = vunpack.c.l.b16 %v253
        %v402 = vunpack.c.l.b16 %v254
        %v403 = vunpack.c.l.b16 %v255
        %v404 = vunpack.c.l.b16 %v256
        %v405 = vunpack.c.l.b16 %v257
        %v406 = vunpack.c.l.b16 %v258
        %v407 = vunpack.c.l.b16 %v259
        %v408 = vunpack.c.l.b16 %v260
        %v409 = vunpack.c.l.b16 %v261
        %v410 = vunpack.c.l.b16 %v262
        %v411 = vunpack.c.l.b16 %v263
        %v412 = vunpack.c.l.b16 %v264
        %v413 = vunpack.c.l.b16 %v265
        %v414 = vunpack.c.l.b16 %v266
        %v415 = vunpack.c.l.b16 %v267
        %v416 = vunpack.c.l.b16 %v268
        %v417 = vunpack.c.l.b16 %v269
        %v418 = vunpack.c.l.b16 %v270
        %v419 = vunpack.c.l.b16 %v271
        %v420 = vunpack.c.l.b16 %v272
        %v421 = vunpack.c.l.b16 %v273
        %v422 = vunpack.c.l.b16 %v274
        %v423 = vunpack.c.l.b16 %v275
        %v424 = vunpack.c.l.b16 %v276
        %v425 = vunpack.c.l.b16 %v277
        %v426 = vunpack.c.l.b16 %v278
        %v427 = vunpack.c.l.b16 %v279
        %v428 = vunpack.c.l.b16 %v280
        %v429 = vunpack.c.l.b16 %v281
        %v430 = vunpack.c.l.b16 %v282
        %v431 = vunpack.c.l.b16 %v283
        %v432 = vunpack.c.l.b16 %v284
        %v433 = vunpack.c.l.b16 %v285
        %v434 = vunpack.c.l.b16 %v286
        %v435 = vunpack.c.l.b16 %v287
        %v436 = vunpack.c.l.b16 %v288
        %v437 = vunpack.c.l.b16 %v289
        %v438 = vunpack.c.l.b16 %v290
        %v439 = vunpack.c.l.b16 %v291
        %v440 = vunpack.c.l.b16 %v292
        %v441 = vunpack.c.l.b16 %v293
        %v442 = vunpack.c.l.b16 %v294
        %v443 = vunpack.c.l.b16 %v295
        %v444 = vunpack.c.l.b16 %v296
        %v445 = vunpack.c.l.b16 %v297
        %v446 = vunpack.c.l.b16 %v298
        %v447 = vunpack.c.l.b16 %v299
        %v448 = vunpack.c.l.b16 %v300
        %v449 = vunpack.c.l.b16 %v301
        %v450 = vunpack.c.l.b16 %v302
        %v451 = vunpack.c.l.b16 %v303
        %v452 = vunpack.c.l.b16 %v304
        %v453 = vunpack.c.l.b16 %v305
        %v454 = vunpack.c.l.b16 %v306
        %v455 = vunpack.c.l.b16 %v307
        %v456 = vunpack.c.l.b16 %v308
        %v457 = vunpack.c.l.b16 %v309
        %v458 = vunpack.c.l.b16 %v310
        %v459 = vunpack.c.l.b16 %v311
        %v460 = vunpack.c.l.b16 %v312
        %v461 = vunpack.c.l.b16 %v313
        %v462 = vunpack.c.l.b16 %v314
        %v463 = vpack.c.b16 %v400, %v399
        %v464 = vpack.c.b16 %v402, %v401
        %v465 = vpack.c.b16 %v404, %v403
        %v466 = vpack.c.b16 %v406, %v405
        %v467 = vpack.c.b16 %v408, %v407
        %v468 = vpack.c.b16 %v410, %v409
        %v469 = vpack.c.b16 %v412, %v411
        %v470 = vpack.c.b16 %v414, %v413
        %v471 = vpack.c.b16 %v416, %v415
        %v472 = vpack.c.b16 %v418, %v417
        %v473 = vpack.c.b16 %v420, %v419
        %v474 = vpack.c.b16 %v422, %v421
        %v475 = vpack.c.b16 %v424, %v423
        %v476 = vpack.c.b16 %v426, %v425
        %v477 = vpack.c.b16 %v428, %v427
        %v478 = vpack.c.b16 %v430, %v429
        %v479 = vpack.c.b16 %v432, %v431
        %v480 = vpack.c.b16 %v434, %v433
        %v481 = vpack.c.b16 %v436, %v435
        %v482 = vpack.c.b16 %v438, %v437
        %v483 = vpack.c.b16 %v440, %v439
        %v484 = vpack.c.b16 %v442, %v441
        %v485 = vpack.c.b16 %v444, %v443
        %v486 = vpack.c.b16 %v446, %v445
        %v487 = vpack.c.b16 %v448, %v447
        %v488 = vpack.c.b16 %v450, %v449
        %v489 = vpack.c.b16 %v452, %v451
        %v490 = vpack.c.b16 %v454, %v453
        %v491 = vpack.c.b16 %v456, %v455
        %v492 = vpack.c.b16 %v458, %v457
        %v493 = vpack.c.b16 %v460, %v459
        %v494 = vpack.c.b16 %v462, %v461
        %v543 = vunpack.c.l.b16 %v315
        %v544 = vunpack.c.l.b16 %v316
        %v545 = vunpack.c.l.b16 %v317
        %v546 = vunpack.c.l.b16 %v318
        %v547 = vunpack.c.l.b16 %v319
        %v548 = vunpack.c.l.b16 %v320
        %v549 = vunpack.c.l.b16 %v321
        %v550 = vunpack.c.l.b16 %v322
        %v551 = vunpack.c.l.b16 %v323
        %v552 = vunpack.c.l.b16 %v324
        %v553 = vunpack.c.l.b16 %v325
        %v554 = vunpack.c.l.b16 %v326
        %v555 = vunpack.c.l.b16 %v327
        %v556 = vunpack.c.l.b16 %v328
        %v557 = vunpack.c.l.b16 %v329
        %v558 = vunpack.c.l.b16 %v330
        %v559 = vpack.c.b16 %v544, %v543
        %v560 = vpack.c.b16 %v546, %v545
        %v561 = vpack.c.b16 %v548, %v547
        %v562 = vpack.c.b16 %v550, %v549
        %v563 = vpack.c.b16 %v552, %v551
        %v564 = vpack.c.b16 %v554, %v553
        %v565 = vpack.c.b16 %v556, %v555
        %v566 = vpack.c.b16 %v558, %v557
        %575 = vmatpush.bf16.msra.mxu0 %v566
        %576 = vmatpush.bf16.msra.mxu0 %v565
        %577 = vmatpush.bf16.msra.mxu0 %v564
        %578 = vmatpush.bf16.msra.mxu0 %v563
        %579 = vmatpush.bf16.msra.mxu0 %v562
        %580 = vmatpush.bf16.msra.mxu0 %v561
        %581 = vmatpush.bf16.msra.mxu0 %v560
        %582 = vmatpush.bf16.msra.mxu0 %v559
        %583 = vmatmul.bf16.gmra.mxu0 %v463
        %v584 = vpop.f32.mrf.mxu0
        %v585 = vadd.f32 %v333, %v584
        %v586 = vpop.f32.mrf.mxu0
        %v587 = vadd.f32 %v333, %v586
        %588 = vmatmul.bf16.gmra.mxu0 %v464
        %v589 = vpop.f32.mrf.mxu0
        %v590 = vadd.f32 %v333, %v589
        %v591 = vpop.f32.mrf.mxu0
        %v592 = vadd.f32 %v333, %v591
        %593 = vmatmul.bf16.gmra.mxu0 %v465
        %v594 = vpop.f32.mrf.mxu0
        %v595 = vadd.f32 %v333, %v594
        %v596 = vpop.f32.mrf.mxu0
        %v597 = vadd.f32 %v333, %v596
        %598 = vmatmul.bf16.gmra.mxu0 %v466
        %v599 = vpop.f32.mrf.mxu0
        %v600 = vadd.f32 %v333, %v599
        %v601 = vpop.f32.mrf.mxu0
        %v602 = vadd.f32 %v333, %v601
        %603 = vmatmul.bf16.gmra.mxu0 %v467
        %v604 = vpop.f32.mrf.mxu0
        %v605 = vadd.f32 %v333, %v604
        %v606 = vpop.f32.mrf.mxu0
        %v607 = vadd.f32 %v333, %v606
        %608 = vmatmul.bf16.gmra.mxu0 %v468
        %v609 = vpop.f32.mrf.mxu0
        %v610 = vadd.f32 %v333, %v609
        %v611 = vpop.f32.mrf.mxu0
        %v612 = vadd.f32 %v333, %v611
        %613 = vmatmul.bf16.gmra.mxu0 %v469
        %v614 = vpop.f32.mrf.mxu0
        %v615 = vadd.f32 %v333, %v614
        %v616 = vpop.f32.mrf.mxu0
        %v617 = vadd.f32 %v333, %v616
        %618 = vmatmul.bf16.gmra.mxu0 %v470
        %v619 = vpop.f32.mrf.mxu0
        %v620 = vadd.f32 %v333, %v619
        %v621 = vpop.f32.mrf.mxu0
        %v622 = vadd.f32 %v333, %v621
        %623 = vmatmul.bf16.gmra.mxu0 %v471
        %v624 = vpop.f32.mrf.mxu0
        %v625 = vadd.f32 %v333, %v624
        %v626 = vpop.f32.mrf.mxu0
        %v627 = vadd.f32 %v333, %v626
        %628 = vmatmul.bf16.gmra.mxu0 %v472
        %v629 = vpop.f32.mrf.mxu0
        %v630 = vadd.f32 %v333, %v629
        %v631 = vpop.f32.mrf.mxu0
        %v632 = vadd.f32 %v333, %v631
        %633 = vmatmul.bf16.gmra.mxu0 %v473
        %v634 = vpop.f32.mrf.mxu0
        %v635 = vadd.f32 %v333, %v634
        %v636 = vpop.f32.mrf.mxu0
        %v637 = vadd.f32 %v333, %v636
        %638 = vmatmul.bf16.gmra.mxu0 %v474
        %v639 = vpop.f32.mrf.mxu0
        %v640 = vadd.f32 %v333, %v639
        %v641 = vpop.f32.mrf.mxu0
        %v642 = vadd.f32 %v333, %v641
        %643 = vmatmul.bf16.gmra.mxu0 %v475
        %v644 = vpop.f32.mrf.mxu0
        %v645 = vadd.f32 %v333, %v644
        %v646 = vpop.f32.mrf.mxu0
        %v647 = vadd.f32 %v333, %v646
        %648 = vmatmul.bf16.gmra.mxu0 %v476
        %v649 = vpop.f32.mrf.mxu0
        %v650 = vadd.f32 %v333, %v649
        %v651 = vpop.f32.mrf.mxu0
        %v652 = vadd.f32 %v333, %v651
        %653 = vmatmul.bf16.gmra.mxu0 %v477
        %v654 = vpop.f32.mrf.mxu0
        %v655 = vadd.f32 %v333, %v654
        %v656 = vpop.f32.mrf.mxu0
        %v657 = vadd.f32 %v333, %v656
        %658 = vmatmul.bf16.gmra.mxu0 %v478
        %v659 = vpop.f32.mrf.mxu0
        %v660 = vadd.f32 %v333, %v659
        %v661 = vpop.f32.mrf.mxu0
        %v662 = vadd.f32 %v333, %v661
        %663 = vmatmul.bf16.gmra.mxu0 %v479
        %v664 = vpop.f32.mrf.mxu0
        %v665 = vadd.f32 %v333, %v664
        %v666 = vpop.f32.mrf.mxu0
        %v667 = vadd.f32 %v333, %v666
        %668 = vmatmul.bf16.gmra.mxu0 %v480
        %v669 = vpop.f32.mrf.mxu0
        %v670 = vadd.f32 %v333, %v669
        %v671 = vpop.f32.mrf.mxu0
        %v672 = vadd.f32 %v333, %v671
        %673 = vmatmul.bf16.gmra.mxu0 %v481
        %v674 = vpop.f32.mrf.mxu0
        %v675 = vadd.f32 %v333, %v674
        %v676 = vpop.f32.mrf.mxu0
        %v677 = vadd.f32 %v333, %v676
        %678 = vmatmul.bf16.gmra.mxu0 %v482
        %v679 = vpop.f32.mrf.mxu0
        %v680 = vadd.f32 %v333, %v679
        %v681 = vpop.f32.mrf.mxu0
        %v682 = vadd.f32 %v333, %v681
        %683 = vmatmul.bf16.gmra.mxu0 %v483
        %v684 = vpop.f32.mrf.mxu0
        %v685 = vadd.f32 %v333, %v684
        %v686 = vpop.f32.mrf.mxu0
        %v687 = vadd.f32 %v333, %v686
        %688 = vmatmul.bf16.gmra.mxu0 %v484
        %v689 = vpop.f32.mrf.mxu0
        %v690 = vadd.f32 %v333, %v689
        %v691 = vpop.f32.mrf.mxu0
        %v692 = vadd.f32 %v333, %v691
        %693 = vmatmul.bf16.gmra.mxu0 %v485
        %v694 = vpop.f32.mrf.mxu0
        %v695 = vadd.f32 %v333, %v694
        %v696 = vpop.f32.mrf.mxu0
        %v697 = vadd.f32 %v333, %v696
        %698 = vmatmul.bf16.gmra.mxu0 %v486
        %v699 = vpop.f32.mrf.mxu0
        %v700 = vadd.f32 %v333, %v699
        %v701 = vpop.f32.mrf.mxu0
        %v702 = vadd.f32 %v333, %v701
        %703 = vmatmul.bf16.gmra.mxu0 %v487
        %v704 = vpop.f32.mrf.mxu0
        %v705 = vadd.f32 %v333, %v704
        %v706 = vpop.f32.mrf.mxu0
        %v707 = vadd.f32 %v333, %v706
        %708 = vmatmul.bf16.gmra.mxu0 %v488
        %v709 = vpop.f32.mrf.mxu0
        %v710 = vadd.f32 %v333, %v709
        %v711 = vpop.f32.mrf.mxu0
        %v712 = vadd.f32 %v333, %v711
        %713 = vmatmul.bf16.gmra.mxu0 %v489
        %v714 = vpop.f32.mrf.mxu0
        %v715 = vadd.f32 %v333, %v714
        %v716 = vpop.f32.mrf.mxu0
        %v717 = vadd.f32 %v333, %v716
        %718 = vmatmul.bf16.gmra.mxu0 %v490
        %v719 = vpop.f32.mrf.mxu0
        %v720 = vadd.f32 %v333, %v719
        %v721 = vpop.f32.mrf.mxu0
        %v722 = vadd.f32 %v333, %v721
        %723 = vmatmul.bf16.gmra.mxu0 %v491
        %v724 = vpop.f32.mrf.mxu0
        %v725 = vadd.f32 %v333, %v724
        %v726 = vpop.f32.mrf.mxu0
        %v727 = vadd.f32 %v333, %v726
        %728 = vmatmul.bf16.gmra.mxu0 %v492
        %v729 = vpop.f32.mrf.mxu0
        %v730 = vadd.f32 %v333, %v729
        %v731 = vpop.f32.mrf.mxu0
        %v732 = vadd.f32 %v333, %v731
        %733 = vmatmul.bf16.gmra.mxu0 %v493
        %v734 = vpop.f32.mrf.mxu0
        %v735 = vadd.f32 %v333, %v734
        %v736 = vpop.f32.mrf.mxu0
        %v737 = vadd.f32 %v333, %v736
        %738 = vmatmul.bf16.gmra.mxu0 %v494
        %v739 = vpop.f32.mrf.mxu0
        %v740 = vadd.f32 %v333, %v739
        %v741 = vpop.f32.mrf.mxu0
        %v742 = vadd.f32 %v333, %v741
        %743 = vdwg.mxu0
        %v744 = vmax.f32 %v585, 0.0
        %v745 = vmax.f32 %v587, 0.0
        %v746 = vmax.f32 %v590, 0.0
        %v747 = vmax.f32 %v592, 0.0
        %v748 = vmax.f32 %v595, 0.0
        %v749 = vmax.f32 %v597, 0.0
        %v750 = vmax.f32 %v600, 0.0
        %v751 = vmax.f32 %v602, 0.0
        %v752 = vmax.f32 %v605, 0.0
        %v753 = vmax.f32 %v607, 0.0
        %v754 = vmax.f32 %v610, 0.0
        %v755 = vmax.f32 %v612, 0.0
        %v756 = vmax.f32 %v615, 0.0
        %v757 = vmax.f32 %v617, 0.0
        %v758 = vmax.f32 %v620, 0.0
        %v759 = vmax.f32 %v622, 0.0
        %v760 = vmax.f32 %v625, 0.0
        %v761 = vmax.f32 %v627, 0.0
        %v762 = vmax.f32 %v630, 0.0
        %v763 = vmax.f32 %v632, 0.0
        %v764 = vmax.f32 %v635, 0.0
        %v765 = vmax.f32 %v637, 0.0
        %v766 = vmax.f32 %v640, 0.0
        %v767 = vmax.f32 %v642, 0.0
        %v768 = vmax.f32 %v645, 0.0
        %v769 = vmax.f32 %v647, 0.0
        %v770 = vmax.f32 %v650, 0.0
        %v771 = vmax.f32 %v652, 0.0
        %v772 = vmax.f32 %v655, 0.0
        %v773 = vmax.f32 %v657, 0.0
        %v774 = vmax.f32 %v660, 0.0
        %v775 = vmax.f32 %v662, 0.0
        %v776 = vmax.f32 %v665, 0.0
        %v777 = vmax.f32 %v667, 0.0
        %v778 = vmax.f32 %v670, 0.0
        %v779 = vmax.f32 %v672, 0.0
        %v780 = vmax.f32 %v675, 0.0
        %v781 = vmax.f32 %v677, 0.0
        %v782 = vmax.f32 %v680, 0.0
        %v783 = vmax.f32 %v682, 0.0
        %v784 = vmax.f32 %v685, 0.0
        %v785 = vmax.f32 %v687, 0.0
        %v786 = vmax.f32 %v690, 0.0
        %v787 = vmax.f32 %v692, 0.0
        %v788 = vmax.f32 %v695, 0.0
        %v789 = vmax.f32 %v697, 0.0
        %v790 = vmax.f32 %v700, 0.0
        %v791 = vmax.f32 %v702, 0.0
        %v792 = vmax.f32 %v705, 0.0
        %v793 = vmax.f32 %v707, 0.0
        %v794 = vmax.f32 %v710, 0.0
        %v795 = vmax.f32 %v712, 0.0
        %v796 = vmax.f32 %v715, 0.0
        %v797 = vmax.f32 %v717, 0.0
        %v798 = vmax.f32 %v720, 0.0
        %v799 = vmax.f32 %v722, 0.0
        %v800 = vmax.f32 %v725, 0.0
        %v801 = vmax.f32 %v727, 0.0
        %v802 = vmax.f32 %v730, 0.0
        %v803 = vmax.f32 %v732, 0.0
        %v804 = vmax.f32 %v735, 0.0
        %v805 = vmax.f32 %v737, 0.0
        %v806 = vmax.f32 %v740, 0.0
        %v807 = vmax.f32 %v742, 0.0
        %v808 = vld [vmem:[%s3] sm:$0xff]
        %v809 = vld [vmem:[%s3 + $0x8] sm:$0xff]
        %v810 = vld [vmem:[%s3 + $0x10] sm:$0xff]
        %v811 = vld [vmem:[%s3 + $0x18] sm:$0xff]
        %v812 = vld [vmem:[#allocation2] sm:$0x1]
        %v814 = vperm.slane %v812, 0
        %vm816 = vcmask 261120
        %v818 = vsel %vm816, %v744, 0
        %v821 = vsel %vm816, %v745, 0
        %v824 = vsel %vm816, %v746, 0
        %v827 = vsel %vm816, %v747, 0
        %v830 = vsel %vm816, %v748, 0
        %v833 = vsel %vm816, %v749, 0
        %v836 = vsel %vm816, %v750, 0
        %v839 = vsel %vm816, %v751, 0
        %v842 = vsel %vm816, %v752, 0
        %v845 = vsel %vm816, %v753, 0
        %v848 = vsel %vm816, %v754, 0
        %v851 = vsel %vm816, %v755, 0
        %v854 = vsel %vm816, %v756, 0
        %v857 = vsel %vm816, %v757, 0
        %v860 = vsel %vm816, %v758, 0
        %v863 = vsel %vm816, %v759, 0
        %v866 = vsel %vm816, %v760, 0
        %v869 = vsel %vm816, %v761, 0
        %v872 = vsel %vm816, %v762, 0
        %v875 = vsel %vm816, %v763, 0
        %v878 = vsel %vm816, %v764, 0
        %v881 = vsel %vm816, %v765, 0
        %v884 = vsel %vm816, %v766, 0
        %v887 = vsel %vm816, %v767, 0
        %v890 = vsel %vm816, %v768, 0
        %v893 = vsel %vm816, %v769, 0
        %v896 = vsel %vm816, %v770, 0
        %v899 = vsel %vm816, %v771, 0
        %v902 = vsel %vm816, %v772, 0
        %v905 = vsel %vm816, %v773, 0
        %v908 = vsel %vm816, %v774, 0
        %v911 = vsel %vm816, %v775, 0
        %v914 = vsel %vm816, %v776, 0
        %v917 = vsel %vm816, %v777, 0
        %v920 = vsel %vm816, %v778, 0
        %v923 = vsel %vm816, %v779, 0
        %v926 = vsel %vm816, %v780, 0
        %v929 = vsel %vm816, %v781, 0
        %v932 = vsel %vm816, %v782, 0
        %v935 = vsel %vm816, %v783, 0
        %v938 = vsel %vm816, %v784, 0
        %v941 = vsel %vm816, %v785, 0
        %v944 = vsel %vm816, %v786, 0
        %v947 = vsel %vm816, %v787, 0
        %v950 = vsel %vm816, %v788, 0
        %v953 = vsel %vm816, %v789, 0
        %v956 = vsel %vm816, %v790, 0
        %v959 = vsel %vm816, %v791, 0
        %v962 = vsel %vm816, %v792, 0
        %v965 = vsel %vm816, %v793, 0
        %v968 = vsel %vm816, %v794, 0
        %v971 = vsel %vm816, %v795, 0
        %v974 = vsel %vm816, %v796, 0
        %v977 = vsel %vm816, %v797, 0
        %v980 = vsel %vm816, %v798, 0
        %v983 = vsel %vm816, %v799, 0
        %v986 = vsel %vm816, %v800, 0
        %v989 = vsel %vm816, %v801, 0
        %v992 = vsel %vm816, %v802, 0
        %v995 = vsel %vm816, %v803, 0
        %v998 = vsel %vm816, %v804, 0
        %v1001 = vsel %vm816, %v805, 0
        %v1004 = vsel %vm816, %v806, 0
        %v1007 = vsel %vm816, %v807, 0
        %1009 = vmatpush.msra.mxu0 0.0
        %1010 = vmatpush.msra.mxu0 0.0
        %1011 = vmatpush.msra.mxu0 0.0
        %1012 = vmatpush.msra.mxu0 0.0
        %1013 = vmatpush.msra.mxu0 0.0
        %1014 = vmatpush.msra.mxu0 0.0
        %1015 = vmatpush.msra.mxu0 0.0
        %1016 = vmatpush.msra.mxu0 0.0
        %1017 = vmatpush.msra.mxu0 0.0
        %1018 = vmatpush.msra.mxu0 0.0
        %1019 = vmatpush.msra.mxu0 0.0
        %1020 = vmatpush.msra.mxu0 0.0
        %1021 = vmatpush.msra.mxu0 %v811
        %1022 = vmatpush.msra.mxu0 %v810
        %1023 = vmatpush.msra.mxu0 %v809
        %1024 = vmatpush.msra.mxu0 %v808
        %1025 = vmatmul.f32.gmra.mxu0 %v818
        %v1026 = vpop.f32.mrf.mxu0
        %v1027 = vadd.f32 %v814, %v1026
        %1028 = vmatmul.f32.gmra.mxu0 %v821
        %v1029 = vpop.f32.mrf.mxu0
        %v1030 = vadd.f32 %v814, %v1029
        %1031 = vmatmul.f32.gmra.mxu0 %v824
        %v1032 = vpop.f32.mrf.mxu0
        %v1033 = vadd.f32 %v814, %v1032
        %1034 = vmatmul.f32.gmra.mxu0 %v827
        %v1035 = vpop.f32.mrf.mxu0
        %v1036 = vadd.f32 %v814, %v1035
        %1037 = vmatmul.f32.gmra.mxu0 %v830
        %v1038 = vpop.f32.mrf.mxu0
        %v1039 = vadd.f32 %v814, %v1038
        %1040 = vmatmul.f32.gmra.mxu0 %v833
        %v1041 = vpop.f32.mrf.mxu0
        %v1042 = vadd.f32 %v814, %v1041
        %1043 = vmatmul.f32.gmra.mxu0 %v836
        %v1044 = vpop.f32.mrf.mxu0
        %v1045 = vadd.f32 %v814, %v1044
        %1046 = vmatmul.f32.gmra.mxu0 %v839
        %v1047 = vpop.f32.mrf.mxu0
        %v1048 = vadd.f32 %v814, %v1047
        %1049 = vmatmul.f32.gmra.mxu0 %v842
        %v1050 = vpop.f32.mrf.mxu0
        %v1051 = vadd.f32 %v814, %v1050
        %1052 = vmatmul.f32.gmra.mxu0 %v845
        %v1053 = vpop.f32.mrf.mxu0
        %v1054 = vadd.f32 %v814, %v1053
        %1055 = vmatmul.f32.gmra.mxu0 %v848
        %v1056 = vpop.f32.mrf.mxu0
        %v1057 = vadd.f32 %v814, %v1056
        %1058 = vmatmul.f32.gmra.mxu0 %v851
        %v1059 = vpop.f32.mrf.mxu0
        %v1060 = vadd.f32 %v814, %v1059
        %1061 = vmatmul.f32.gmra.mxu0 %v854
        %v1062 = vpop.f32.mrf.mxu0
        %v1063 = vadd.f32 %v814, %v1062
        %1064 = vmatmul.f32.gmra.mxu0 %v857
        %v1065 = vpop.f32.mrf.mxu0
        %v1066 = vadd.f32 %v814, %v1065
        %1067 = vmatmul.f32.gmra.mxu0 %v860
        %v1068 = vpop.f32.mrf.mxu0
        %v1069 = vadd.f32 %v814, %v1068
        %1070 = vmatmul.f32.gmra.mxu0 %v863
        %v1071 = vpop.f32.mrf.mxu0
        %v1072 = vadd.f32 %v814, %v1071
        %1073 = vmatmul.f32.gmra.mxu0 %v866
        %v1074 = vpop.f32.mrf.mxu0
        %v1075 = vadd.f32 %v814, %v1074
        %1076 = vmatmul.f32.gmra.mxu0 %v869
        %v1077 = vpop.f32.mrf.mxu0
        %v1078 = vadd.f32 %v814, %v1077
        %1079 = vmatmul.f32.gmra.mxu0 %v872
        %v1080 = vpop.f32.mrf.mxu0
        %v1081 = vadd.f32 %v814, %v1080
        %1082 = vmatmul.f32.gmra.mxu0 %v875
        %v1083 = vpop.f32.mrf.mxu0
        %v1084 = vadd.f32 %v814, %v1083
        %1085 = vmatmul.f32.gmra.mxu0 %v878
        %v1086 = vpop.f32.mrf.mxu0
        %v1087 = vadd.f32 %v814, %v1086
        %1088 = vmatmul.f32.gmra.mxu0 %v881
        %v1089 = vpop.f32.mrf.mxu0
        %v1090 = vadd.f32 %v814, %v1089
        %1091 = vmatmul.f32.gmra.mxu0 %v884
        %v1092 = vpop.f32.mrf.mxu0
        %v1093 = vadd.f32 %v814, %v1092
        %1094 = vmatmul.f32.gmra.mxu0 %v887
        %v1095 = vpop.f32.mrf.mxu0
        %v1096 = vadd.f32 %v814, %v1095
        %1097 = vmatmul.f32.gmra.mxu0 %v890
        %v1098 = vpop.f32.mrf.mxu0
        %v1099 = vadd.f32 %v814, %v1098
        %1100 = vmatmul.f32.gmra.mxu0 %v893
        %v1101 = vpop.f32.mrf.mxu0
        %v1102 = vadd.f32 %v814, %v1101
        %1103 = vmatmul.f32.gmra.mxu0 %v896
        %v1104 = vpop.f32.mrf.mxu0
        %v1105 = vadd.f32 %v814, %v1104
        %1106 = vmatmul.f32.gmra.mxu0 %v899
        %v1107 = vpop.f32.mrf.mxu0
        %v1108 = vadd.f32 %v814, %v1107
        %1109 = vmatmul.f32.gmra.mxu0 %v902
        %v1110 = vpop.f32.mrf.mxu0
        %v1111 = vadd.f32 %v814, %v1110
        %1112 = vmatmul.f32.gmra.mxu0 %v905
        %v1113 = vpop.f32.mrf.mxu0
        %v1114 = vadd.f32 %v814, %v1113
        %1115 = vmatmul.f32.gmra.mxu0 %v908
        %v1116 = vpop.f32.mrf.mxu0
        %v1117 = vadd.f32 %v814, %v1116
        %1118 = vmatmul.f32.gmra.mxu0 %v911
        %v1119 = vpop.f32.mrf.mxu0
        %v1120 = vadd.f32 %v814, %v1119
        %1121 = vmatmul.f32.gmra.mxu0 %v914
        %v1122 = vpop.f32.mrf.mxu0
        %v1123 = vadd.f32 %v814, %v1122
        %1124 = vmatmul.f32.gmra.mxu0 %v917
        %v1125 = vpop.f32.mrf.mxu0
        %v1126 = vadd.f32 %v814, %v1125
        %1127 = vmatmul.f32.gmra.mxu0 %v920
        %v1128 = vpop.f32.mrf.mxu0
        %v1129 = vadd.f32 %v814, %v1128
        %1130 = vmatmul.f32.gmra.mxu0 %v923
        %v1131 = vpop.f32.mrf.mxu0
        %v1132 = vadd.f32 %v814, %v1131
        %1133 = vmatmul.f32.gmra.mxu0 %v926
        %v1134 = vpop.f32.mrf.mxu0
        %v1135 = vadd.f32 %v814, %v1134
        %1136 = vmatmul.f32.gmra.mxu0 %v929
        %v1137 = vpop.f32.mrf.mxu0
        %v1138 = vadd.f32 %v814, %v1137
        %1139 = vmatmul.f32.gmra.mxu0 %v932
        %v1140 = vpop.f32.mrf.mxu0
        %v1141 = vadd.f32 %v814, %v1140
        %1142 = vmatmul.f32.gmra.mxu0 %v935
        %v1143 = vpop.f32.mrf.mxu0
        %v1144 = vadd.f32 %v814, %v1143
        %1145 = vmatmul.f32.gmra.mxu0 %v938
        %v1146 = vpop.f32.mrf.mxu0
        %v1147 = vadd.f32 %v814, %v1146
        %1148 = vmatmul.f32.gmra.mxu0 %v941
        %v1149 = vpop.f32.mrf.mxu0
        %v1150 = vadd.f32 %v814, %v1149
        %1151 = vmatmul.f32.gmra.mxu0 %v944
        %v1152 = vpop.f32.mrf.mxu0
        %v1153 = vadd.f32 %v814, %v1152
        %1154 = vmatmul.f32.gmra.mxu0 %v947
        %v1155 = vpop.f32.mrf.mxu0
        %v1156 = vadd.f32 %v814, %v1155
        %1157 = vmatmul.f32.gmra.mxu0 %v950
        %v1158 = vpop.f32.mrf.mxu0
        %v1159 = vadd.f32 %v814, %v1158
        %1160 = vmatmul.f32.gmra.mxu0 %v953
        %v1161 = vpop.f32.mrf.mxu0
        %v1162 = vadd.f32 %v814, %v1161
        %1163 = vmatmul.f32.gmra.mxu0 %v956
        %v1164 = vpop.f32.mrf.mxu0
        %v1165 = vadd.f32 %v814, %v1164
        %1166 = vmatmul.f32.gmra.mxu0 %v959
        %v1167 = vpop.f32.mrf.mxu0
        %v1168 = vadd.f32 %v814, %v1167
        %1169 = vmatmul.f32.gmra.mxu0 %v962
        %v1170 = vpop.f32.mrf.mxu0
        %v1171 = vadd.f32 %v814, %v1170
        %1172 = vmatmul.f32.gmra.mxu0 %v965
        %v1173 = vpop.f32.mrf.mxu0
        %v1174 = vadd.f32 %v814, %v1173
        %1175 = vmatmul.f32.gmra.mxu0 %v968
        %v1176 = vpop.f32.mrf.mxu0
        %v1177 = vadd.f32 %v814, %v1176
        %1178 = vmatmul.f32.gmra.mxu0 %v971
        %v1179 = vpop.f32.mrf.mxu0
        %v1180 = vadd.f32 %v814, %v1179
        %1181 = vmatmul.f32.gmra.mxu0 %v974
        %v1182 = vpop.f32.mrf.mxu0
        %v1183 = vadd.f32 %v814, %v1182
        %1184 = vmatmul.f32.gmra.mxu0 %v977
        %v1185 = vpop.f32.mrf.mxu0
        %v1186 = vadd.f32 %v814, %v1185
        %1187 = vmatmul.f32.gmra.mxu0 %v980
        %v1188 = vpop.f32.mrf.mxu0
        %v1189 = vadd.f32 %v814, %v1188
        %1190 = vmatmul.f32.gmra.mxu0 %v983
        %v1191 = vpop.f32.mrf.mxu0
        %v1192 = vadd.f32 %v814, %v1191
        %1193 = vmatmul.f32.gmra.mxu0 %v986
        %v1194 = vpop.f32.mrf.mxu0
        %v1195 = vadd.f32 %v814, %v1194
        %1196 = vmatmul.f32.gmra.mxu0 %v989
        %v1197 = vpop.f32.mrf.mxu0
        %v1198 = vadd.f32 %v814, %v1197
        %1199 = vmatmul.f32.gmra.mxu0 %v992
        %v1200 = vpop.f32.mrf.mxu0
        %v1201 = vadd.f32 %v814, %v1200
        %1202 = vmatmul.f32.gmra.mxu0 %v995
        %v1203 = vpop.f32.mrf.mxu0
        %v1204 = vadd.f32 %v814, %v1203
        %1205 = vmatmul.f32.gmra.mxu0 %v998
        %v1206 = vpop.f32.mrf.mxu0
        %v1207 = vadd.f32 %v814, %v1206
        %1208 = vmatmul.f32.gmra.mxu0 %v1001
        %v1209 = vpop.f32.mrf.mxu0
        %v1210 = vadd.f32 %v814, %v1209
        %1211 = vmatmul.f32.gmra.mxu0 %v1004
        %v1212 = vpop.f32.mrf.mxu0
        %v1213 = vadd.f32 %v814, %v1212
        %1214 = vmatmul.f32.gmra.mxu0 %v1007
        %v1215 = vpop.f32.mrf.mxu0
        %v1216 = vadd.f32 %v814, %v1215
        %1217 = vdwg.mxu0
        %v1218 = vsub.f32 0.0, %v1027
        %v1219 = vsub.f32 0.0, %v1030
        %v1220 = vsub.f32 0.0, %v1033
        %v1221 = vsub.f32 0.0, %v1036
        %v1222 = vsub.f32 0.0, %v1039
        %v1223 = vsub.f32 0.0, %v1042
        %v1224 = vsub.f32 0.0, %v1045
        %v1225 = vsub.f32 0.0, %v1048
        %v1226 = vsub.f32 0.0, %v1051
        %v1227 = vsub.f32 0.0, %v1054
        %v1228 = vsub.f32 0.0, %v1057
        %v1229 = vsub.f32 0.0, %v1060
        %v1230 = vsub.f32 0.0, %v1063
        %v1231 = vsub.f32 0.0, %v1066
        %v1232 = vsub.f32 0.0, %v1069
        %v1233 = vsub.f32 0.0, %v1072
        %v1234 = vsub.f32 0.0, %v1075
        %v1235 = vsub.f32 0.0, %v1078
        %v1236 = vsub.f32 0.0, %v1081
        %v1237 = vsub.f32 0.0, %v1084
        %v1238 = vsub.f32 0.0, %v1087
        %v1239 = vsub.f32 0.0, %v1090
        %v1240 = vsub.f32 0.0, %v1093
        %v1241 = vsub.f32 0.0, %v1096
        %v1242 = vsub.f32 0.0, %v1099
        %v1243 = vsub.f32 0.0, %v1102
        %v1244 = vsub.f32 0.0, %v1105
        %v1245 = vsub.f32 0.0, %v1108
        %v1246 = vsub.f32 0.0, %v1111
        %v1247 = vsub.f32 0.0, %v1114
        %v1248 = vsub.f32 0.0, %v1117
        %v1249 = vsub.f32 0.0, %v1120
        %v1250 = vsub.f32 0.0, %v1123
        %v1251 = vsub.f32 0.0, %v1126
        %v1252 = vsub.f32 0.0, %v1129
        %v1253 = vsub.f32 0.0, %v1132
        %v1254 = vsub.f32 0.0, %v1135
        %v1255 = vsub.f32 0.0, %v1138
        %v1256 = vsub.f32 0.0, %v1141
        %v1257 = vsub.f32 0.0, %v1144
        %v1258 = vsub.f32 0.0, %v1147
        %v1259 = vsub.f32 0.0, %v1150
        %v1260 = vsub.f32 0.0, %v1153
        %v1261 = vsub.f32 0.0, %v1156
        %v1262 = vsub.f32 0.0, %v1159
        %v1263 = vsub.f32 0.0, %v1162
        %v1264 = vsub.f32 0.0, %v1165
        %v1265 = vsub.f32 0.0, %v1168
        %v1266 = vsub.f32 0.0, %v1171
        %v1267 = vsub.f32 0.0, %v1174
        %v1268 = vsub.f32 0.0, %v1177
        %v1269 = vsub.f32 0.0, %v1180
        %v1270 = vsub.f32 0.0, %v1183
        %v1271 = vsub.f32 0.0, %v1186
        %v1272 = vsub.f32 0.0, %v1189
        %v1273 = vsub.f32 0.0, %v1192
        %v1274 = vsub.f32 0.0, %v1195
        %v1275 = vsub.f32 0.0, %v1198
        %v1276 = vsub.f32 0.0, %v1201
        %v1277 = vsub.f32 0.0, %v1204
        %v1278 = vsub.f32 0.0, %v1207
        %v1279 = vsub.f32 0.0, %v1210
        %v1280 = vsub.f32 0.0, %v1213
        %v1281 = vsub.f32 0.0, %v1216
        %v1282 = vmul.f32 %v1218, 1.442695
        %v1283 = vpow.pop %v1282
        %v1284 = vmul.f32 %v1219, 1.442695
        %v1285 = vpow.pop %v1284
        %v1286 = vmul.f32 %v1220, 1.442695
        %v1287 = vpow.pop %v1286
        %v1288 = vmul.f32 %v1221, 1.442695
        %v1289 = vpow.pop %v1288
        %v1290 = vmul.f32 %v1222, 1.442695
        %v1291 = vpow.pop %v1290
        %v1292 = vmul.f32 %v1223, 1.442695
        %v1293 = vpow.pop %v1292
        %v1294 = vmul.f32 %v1224, 1.442695
        %v1295 = vpow.pop %v1294
        %v1296 = vmul.f32 %v1225, 1.442695
        %v1297 = vpow.pop %v1296
        %v1298 = vmul.f32 %v1226, 1.442695
        %v1299 = vpow.pop %v1298
        %v1300 = vmul.f32 %v1227, 1.442695
        %v1301 = vpow.pop %v1300
        %v1302 = vmul.f32 %v1228, 1.442695
        %v1303 = vpow.pop %v1302
        %v1304 = vmul.f32 %v1229, 1.442695
        %v1305 = vpow.pop %v1304
        %v1306 = vmul.f32 %v1230, 1.442695
        %v1307 = vpow.pop %v1306
        %v1308 = vmul.f32 %v1231, 1.442695
        %v1309 = vpow.pop %v1308
        %v1310 = vmul.f32 %v1232, 1.442695
        %v1311 = vpow.pop %v1310
        %v1312 = vmul.f32 %v1233, 1.442695
        %v1313 = vpow.pop %v1312
        %v1314 = vmul.f32 %v1234, 1.442695
        %v1315 = vpow.pop %v1314
        %v1316 = vmul.f32 %v1235, 1.442695
        %v1317 = vpow.pop %v1316
        %v1318 = vmul.f32 %v1236, 1.442695
        %v1319 = vpow.pop %v1318
        %v1320 = vmul.f32 %v1237, 1.442695
        %v1321 = vpow.pop %v1320
        %v1322 = vmul.f32 %v1238, 1.442695
        %v1323 = vpow.pop %v1322
        %v1324 = vmul.f32 %v1239, 1.442695
        %v1325 = vpow.pop %v1324
        %v1326 = vmul.f32 %v1240, 1.442695
        %v1327 = vpow.pop %v1326
        %v1328 = vmul.f32 %v1241, 1.442695
        %v1329 = vpow.pop %v1328
        %v1330 = vmul.f32 %v1242, 1.442695
        %v1331 = vpow.pop %v1330
        %v1332 = vmul.f32 %v1243, 1.442695
        %v1333 = vpow.pop %v1332
        %v1334 = vmul.f32 %v1244, 1.442695
        %v1335 = vpow.pop %v1334
        %v1336 = vmul.f32 %v1245, 1.442695
        %v1337 = vpow.pop %v1336
        %v1338 = vmul.f32 %v1246, 1.442695
        %v1339 = vpow.pop %v1338
        %v1340 = vmul.f32 %v1247, 1.442695
        %v1341 = vpow.pop %v1340
        %v1342 = vmul.f32 %v1248, 1.442695
        %v1343 = vpow.pop %v1342
        %v1344 = vmul.f32 %v1249, 1.442695
        %v1345 = vpow.pop %v1344
        %v1346 = vmul.f32 %v1250, 1.442695
        %v1347 = vpow.pop %v1346
        %v1348 = vmul.f32 %v1251, 1.442695
        %v1349 = vpow.pop %v1348
        %v1350 = vmul.f32 %v1252, 1.442695
        %v1351 = vpow.pop %v1350
        %v1352 = vmul.f32 %v1253, 1.442695
        %v1353 = vpow.pop %v1352
        %v1354 = vmul.f32 %v1254, 1.442695
        %v1355 = vpow.pop %v1354
        %v1356 = vmul.f32 %v1255, 1.442695
        %v1357 = vpow.pop %v1356
        %v1358 = vmul.f32 %v1256, 1.442695
        %v1359 = vpow.pop %v1358
        %v1360 = vmul.f32 %v1257, 1.442695
        %v1361 = vpow.pop %v1360
        %v1362 = vmul.f32 %v1258, 1.442695
        %v1363 = vpow.pop %v1362
        %v1364 = vmul.f32 %v1259, 1.442695
        %v1365 = vpow.pop %v1364
        %v1366 = vmul.f32 %v1260, 1.442695
        %v1367 = vpow.pop %v1366
        %v1368 = vmul.f32 %v1261, 1.442695
        %v1369 = vpow.pop %v1368
        %v1370 = vmul.f32 %v1262, 1.442695
        %v1371 = vpow.pop %v1370
        %v1372 = vmul.f32 %v1263, 1.442695
        %v1373 = vpow.pop %v1372
        %v1374 = vmul.f32 %v1264, 1.442695
        %v1375 = vpow.pop %v1374
        %v1376 = vmul.f32 %v1265, 1.442695
        %v1377 = vpow.pop %v1376
        %v1378 = vmul.f32 %v1266, 1.442695
        %v1379 = vpow.pop %v1378
        %v1380 = vmul.f32 %v1267, 1.442695
        %v1381 = vpow.pop %v1380
        %v1382 = vmul.f32 %v1268, 1.442695
        %v1383 = vpow.pop %v1382
        %v1384 = vmul.f32 %v1269, 1.442695
        %v1385 = vpow.pop %v1384
        %v1386 = vmul.f32 %v1270, 1.442695
        %v1387 = vpow.pop %v1386
        %v1388 = vmul.f32 %v1271, 1.442695
        %v1389 = vpow.pop %v1388
        %v1390 = vmul.f32 %v1272, 1.442695
        %v1391 = vpow.pop %v1390
        %v1392 = vmul.f32 %v1273, 1.442695
        %v1393 = vpow.pop %v1392
        %v1394 = vmul.f32 %v1274, 1.442695
        %v1395 = vpow.pop %v1394
        %v1396 = vmul.f32 %v1275, 1.442695
        %v1397 = vpow.pop %v1396
        %v1398 = vmul.f32 %v1276, 1.442695
        %v1399 = vpow.pop %v1398
        %v1400 = vmul.f32 %v1277, 1.442695
        %v1401 = vpow.pop %v1400
        %v1402 = vmul.f32 %v1278, 1.442695
        %v1403 = vpow.pop %v1402
        %v1404 = vmul.f32 %v1279, 1.442695
        %v1405 = vpow.pop %v1404
        %v1406 = vmul.f32 %v1280, 1.442695
        %v1407 = vpow.pop %v1406
        %v1408 = vmul.f32 %v1281, 1.442695
        %v1409 = vpow.pop %v1408
        %v1410 = vadd.f32 %v1283, 1.0
        %v1411 = vadd.f32 %v1285, 1.0
        %v1412 = vadd.f32 %v1287, 1.0
        %v1413 = vadd.f32 %v1289, 1.0
        %v1414 = vadd.f32 %v1291, 1.0
        %v1415 = vadd.f32 %v1293, 1.0
        %v1416 = vadd.f32 %v1295, 1.0
        %v1417 = vadd.f32 %v1297, 1.0
        %v1418 = vadd.f32 %v1299, 1.0
        %v1419 = vadd.f32 %v1301, 1.0
        %v1420 = vadd.f32 %v1303, 1.0
        %v1421 = vadd.f32 %v1305, 1.0
        %v1422 = vadd.f32 %v1307, 1.0
        %v1423 = vadd.f32 %v1309, 1.0
        %v1424 = vadd.f32 %v1311, 1.0
        %v1425 = vadd.f32 %v1313, 1.0
        %v1426 = vadd.f32 %v1315, 1.0
        %v1427 = vadd.f32 %v1317, 1.0
        %v1428 = vadd.f32 %v1319, 1.0
        %v1429 = vadd.f32 %v1321, 1.0
        %v1430 = vadd.f32 %v1323, 1.0
        %v1431 = vadd.f32 %v1325, 1.0
        %v1432 = vadd.f32 %v1327, 1.0
        %v1433 = vadd.f32 %v1329, 1.0
        %v1434 = vadd.f32 %v1331, 1.0
        %v1435 = vadd.f32 %v1333, 1.0
        %v1436 = vadd.f32 %v1335, 1.0
        %v1437 = vadd.f32 %v1337, 1.0
        %v1438 = vadd.f32 %v1339, 1.0
        %v1439 = vadd.f32 %v1341, 1.0
        %v1440 = vadd.f32 %v1343, 1.0
        %v1441 = vadd.f32 %v1345, 1.0
        %v1442 = vadd.f32 %v1347, 1.0
        %v1443 = vadd.f32 %v1349, 1.0
        %v1444 = vadd.f32 %v1351, 1.0
        %v1445 = vadd.f32 %v1353, 1.0
        %v1446 = vadd.f32 %v1355, 1.0
        %v1447 = vadd.f32 %v1357, 1.0
        %v1448 = vadd.f32 %v1359, 1.0
        %v1449 = vadd.f32 %v1361, 1.0
        %v1450 = vadd.f32 %v1363, 1.0
        %v1451 = vadd.f32 %v1365, 1.0
        %v1452 = vadd.f32 %v1367, 1.0
        %v1453 = vadd.f32 %v1369, 1.0
        %v1454 = vadd.f32 %v1371, 1.0
        %v1455 = vadd.f32 %v1373, 1.0
        %v1456 = vadd.f32 %v1375, 1.0
        %v1457 = vadd.f32 %v1377, 1.0
        %v1458 = vadd.f32 %v1379, 1.0
        %v1459 = vadd.f32 %v1381, 1.0
        %v1460 = vadd.f32 %v1383, 1.0
        %v1461 = vadd.f32 %v1385, 1.0
        %v1462 = vadd.f32 %v1387, 1.0
        %v1463 = vadd.f32 %v1389, 1.0
        %v1464 = vadd.f32 %v1391, 1.0
        %v1465 = vadd.f32 %v1393, 1.0
        %v1466 = vadd.f32 %v1395, 1.0
        %v1467 = vadd.f32 %v1397, 1.0
        %v1468 = vadd.f32 %v1399, 1.0
        %v1469 = vadd.f32 %v1401, 1.0
        %v1470 = vadd.f32 %v1403, 1.0
        %v1471 = vadd.f32 %v1405, 1.0
        %v1472 = vadd.f32 %v1407, 1.0
        %v1473 = vadd.f32 %v1409, 1.0
        %v1474 = vrcp.pop %v1410
        %v1475 = vmul.f32 %v1410, %v1474
        %v1476 = vsub.f32 1.0, %v1475
        %v1477 = vmul.f32 %v1474, %v1476
        %v1478 = vadd.f32 %v1474, %v1477
        %vm1479 = vweird.f32 %v1410
        %vm1480 = vweird.f32 %v1474
        %vm1481 = vmor %vm1479, %vm1480
        %v1482 = vsel %vm1481, %v1474, %v1478
        %v1483 = vand.u32 2147483647, %v1410
        %vm1484 = vcmp.eq.f32.partialorder %v1483, 8.507059e+37
        %v1485 = vand.u32 %v1410, 2147483648
        %v1486 = vor.u32 1.1754944e-38, %v1485
        %v1487 = vsel %vm1484, %v1486, %v1482
        %v1488 = vmul.f32 1.0, %v1487
        %v1489 = vrcp.pop %v1411
        %v1490 = vmul.f32 %v1411, %v1489
        %v1491 = vsub.f32 1.0, %v1490
        %v1492 = vmul.f32 %v1489, %v1491
        %v1493 = vadd.f32 %v1489, %v1492
        %vm1494 = vweird.f32 %v1411
        %vm1495 = vweird.f32 %v1489
        %vm1496 = vmor %vm1494, %vm1495
        %v1497 = vsel %vm1496, %v1489, %v1493
        %v1498 = vand.u32 2147483647, %v1411
        %vm1499 = vcmp.eq.f32.partialorder %v1498, 8.507059e+37
        %v1500 = vand.u32 %v1411, 2147483648
        %v1501 = vor.u32 1.1754944e-38, %v1500
        %v1502 = vsel %vm1499, %v1501, %v1497
        %v1503 = vmul.f32 1.0, %v1502
        %v1504 = vrcp.pop %v1412
        %v1505 = vmul.f32 %v1412, %v1504
        %v1506 = vsub.f32 1.0, %v1505
        %v1507 = vmul.f32 %v1504, %v1506
        %v1508 = vadd.f32 %v1504, %v1507
        %vm1509 = vweird.f32 %v1412
        %vm1510 = vweird.f32 %v1504
        %vm1511 = vmor %vm1509, %vm1510
        %v1512 = vsel %vm1511, %v1504, %v1508
        %v1513 = vand.u32 2147483647, %v1412
        %vm1514 = vcmp.eq.f32.partialorder %v1513, 8.507059e+37
        %v1515 = vand.u32 %v1412, 2147483648
        %v1516 = vor.u32 1.1754944e-38, %v1515
        %v1517 = vsel %vm1514, %v1516, %v1512
        %v1518 = vmul.f32 1.0, %v1517
        %v1519 = vrcp.pop %v1413
        %v1520 = vmul.f32 %v1413, %v1519
        %v1521 = vsub.f32 1.0, %v1520
        %v1522 = vmul.f32 %v1519, %v1521
        %v1523 = vadd.f32 %v1519, %v1522
        %vm1524 = vweird.f32 %v1413
        %vm1525 = vweird.f32 %v1519
        %vm1526 = vmor %vm1524, %vm1525
        %v1527 = vsel %vm1526, %v1519, %v1523
        %v1528 = vand.u32 2147483647, %v1413
        %vm1529 = vcmp.eq.f32.partialorder %v1528, 8.507059e+37
        %v1530 = vand.u32 %v1413, 2147483648
        %v1531 = vor.u32 1.1754944e-38, %v1530
        %v1532 = vsel %vm1529, %v1531, %v1527
        %v1533 = vmul.f32 1.0, %v1532
        %v1534 = vrcp.pop %v1414
        %v1535 = vmul.f32 %v1414, %v1534
        %v1536 = vsub.f32 1.0, %v1535
        %v1537 = vmul.f32 %v1534, %v1536
        %v1538 = vadd.f32 %v1534, %v1537
        %vm1539 = vweird.f32 %v1414
        %vm1540 = vweird.f32 %v1534
        %vm1541 = vmor %vm1539, %vm1540
        %v1542 = vsel %vm1541, %v1534, %v1538
        %v1543 = vand.u32 2147483647, %v1414
        %vm1544 = vcmp.eq.f32.partialorder %v1543, 8.507059e+37
        %v1545 = vand.u32 %v1414, 2147483648
        %v1546 = vor.u32 1.1754944e-38, %v1545
        %v1547 = vsel %vm1544, %v1546, %v1542
        %v1548 = vmul.f32 1.0, %v1547
        %v1549 = vrcp.pop %v1415
        %v1550 = vmul.f32 %v1415, %v1549
        %v1551 = vsub.f32 1.0, %v1550
        %v1552 = vmul.f32 %v1549, %v1551
        %v1553 = vadd.f32 %v1549, %v1552
        %vm1554 = vweird.f32 %v1415
        %vm1555 = vweird.f32 %v1549
        %vm1556 = vmor %vm1554, %vm1555
        %v1557 = vsel %vm1556, %v1549, %v1553
        %v1558 = vand.u32 2147483647, %v1415
        %vm1559 = vcmp.eq.f32.partialorder %v1558, 8.507059e+37
        %v1560 = vand.u32 %v1415, 2147483648
        %v1561 = vor.u32 1.1754944e-38, %v1560
        %v1562 = vsel %vm1559, %v1561, %v1557
        %v1563 = vmul.f32 1.0, %v1562
        %v1564 = vrcp.pop %v1416
        %v1565 = vmul.f32 %v1416, %v1564
        %v1566 = vsub.f32 1.0, %v1565
        %v1567 = vmul.f32 %v1564, %v1566
        %v1568 = vadd.f32 %v1564, %v1567
        %vm1569 = vweird.f32 %v1416
        %vm1570 = vweird.f32 %v1564
        %vm1571 = vmor %vm1569, %vm1570
        %v1572 = vsel %vm1571, %v1564, %v1568
        %v1573 = vand.u32 2147483647, %v1416
        %vm1574 = vcmp.eq.f32.partialorder %v1573, 8.507059e+37
        %v1575 = vand.u32 %v1416, 2147483648
        %v1576 = vor.u32 1.1754944e-38, %v1575
        %v1577 = vsel %vm1574, %v1576, %v1572
        %v1578 = vmul.f32 1.0, %v1577
        %v1579 = vrcp.pop %v1417
        %v1580 = vmul.f32 %v1417, %v1579
        %v1581 = vsub.f32 1.0, %v1580
        %v1582 = vmul.f32 %v1579, %v1581
        %v1583 = vadd.f32 %v1579, %v1582
        %vm1584 = vweird.f32 %v1417
        %vm1585 = vweird.f32 %v1579
        %vm1586 = vmor %vm1584, %vm1585
        %v1587 = vsel %vm1586, %v1579, %v1583
        %v1588 = vand.u32 2147483647, %v1417
        %vm1589 = vcmp.eq.f32.partialorder %v1588, 8.507059e+37
        %v1590 = vand.u32 %v1417, 2147483648
        %v1591 = vor.u32 1.1754944e-38, %v1590
        %v1592 = vsel %vm1589, %v1591, %v1587
        %v1593 = vmul.f32 1.0, %v1592
        %v1594 = vrcp.pop %v1418
        %v1595 = vmul.f32 %v1418, %v1594
        %v1596 = vsub.f32 1.0, %v1595
        %v1597 = vmul.f32 %v1594, %v1596
        %v1598 = vadd.f32 %v1594, %v1597
        %vm1599 = vweird.f32 %v1418
        %vm1600 = vweird.f32 %v1594
        %vm1601 = vmor %vm1599, %vm1600
        %v1602 = vsel %vm1601, %v1594, %v1598
        %v1603 = vand.u32 2147483647, %v1418
        %vm1604 = vcmp.eq.f32.partialorder %v1603, 8.507059e+37
        %v1605 = vand.u32 %v1418, 2147483648
        %v1606 = vor.u32 1.1754944e-38, %v1605
        %v1607 = vsel %vm1604, %v1606, %v1602
        %v1608 = vmul.f32 1.0, %v1607
        %v1609 = vrcp.pop %v1419
        %v1610 = vmul.f32 %v1419, %v1609
        %v1611 = vsub.f32 1.0, %v1610
        %v1612 = vmul.f32 %v1609, %v1611
        %v1613 = vadd.f32 %v1609, %v1612
        %vm1614 = vweird.f32 %v1419
        %vm1615 = vweird.f32 %v1609
        %vm1616 = vmor %vm1614, %vm1615
        %v1617 = vsel %vm1616, %v1609, %v1613
        %v1618 = vand.u32 2147483647, %v1419
        %vm1619 = vcmp.eq.f32.partialorder %v1618, 8.507059e+37
        %v1620 = vand.u32 %v1419, 2147483648
        %v1621 = vor.u32 1.1754944e-38, %v1620
        %v1622 = vsel %vm1619, %v1621, %v1617
        %v1623 = vmul.f32 1.0, %v1622
        %v1624 = vrcp.pop %v1420
        %v1625 = vmul.f32 %v1420, %v1624
        %v1626 = vsub.f32 1.0, %v1625
        %v1627 = vmul.f32 %v1624, %v1626
        %v1628 = vadd.f32 %v1624, %v1627
        %vm1629 = vweird.f32 %v1420
        %vm1630 = vweird.f32 %v1624
        %vm1631 = vmor %vm1629, %vm1630
        %v1632 = vsel %vm1631, %v1624, %v1628
        %v1633 = vand.u32 2147483647, %v1420
        %vm1634 = vcmp.eq.f32.partialorder %v1633, 8.507059e+37
        %v1635 = vand.u32 %v1420, 2147483648
        %v1636 = vor.u32 1.1754944e-38, %v1635
        %v1637 = vsel %vm1634, %v1636, %v1632
        %v1638 = vmul.f32 1.0, %v1637
        %v1639 = vrcp.pop %v1421
        %v1640 = vmul.f32 %v1421, %v1639
        %v1641 = vsub.f32 1.0, %v1640
        %v1642 = vmul.f32 %v1639, %v1641
        %v1643 = vadd.f32 %v1639, %v1642
        %vm1644 = vweird.f32 %v1421
        %vm1645 = vweird.f32 %v1639
        %vm1646 = vmor %vm1644, %vm1645
        %v1647 = vsel %vm1646, %v1639, %v1643
        %v1648 = vand.u32 2147483647, %v1421
        %vm1649 = vcmp.eq.f32.partialorder %v1648, 8.507059e+37
        %v1650 = vand.u32 %v1421, 2147483648
        %v1651 = vor.u32 1.1754944e-38, %v1650
        %v1652 = vsel %vm1649, %v1651, %v1647
        %v1653 = vmul.f32 1.0, %v1652
        %v1654 = vrcp.pop %v1422
        %v1655 = vmul.f32 %v1422, %v1654
        %v1656 = vsub.f32 1.0, %v1655
        %v1657 = vmul.f32 %v1654, %v1656
        %v1658 = vadd.f32 %v1654, %v1657
        %vm1659 = vweird.f32 %v1422
        %vm1660 = vweird.f32 %v1654
        %vm1661 = vmor %vm1659, %vm1660
        %v1662 = vsel %vm1661, %v1654, %v1658
        %v1663 = vand.u32 2147483647, %v1422
        %vm1664 = vcmp.eq.f32.partialorder %v1663, 8.507059e+37
        %v1665 = vand.u32 %v1422, 2147483648
        %v1666 = vor.u32 1.1754944e-38, %v1665
        %v1667 = vsel %vm1664, %v1666, %v1662
        %v1668 = vmul.f32 1.0, %v1667
        %v1669 = vrcp.pop %v1423
        %v1670 = vmul.f32 %v1423, %v1669
        %v1671 = vsub.f32 1.0, %v1670
        %v1672 = vmul.f32 %v1669, %v1671
        %v1673 = vadd.f32 %v1669, %v1672
        %vm1674 = vweird.f32 %v1423
        %vm1675 = vweird.f32 %v1669
        %vm1676 = vmor %vm1674, %vm1675
        %v1677 = vsel %vm1676, %v1669, %v1673
        %v1678 = vand.u32 2147483647, %v1423
        %vm1679 = vcmp.eq.f32.partialorder %v1678, 8.507059e+37
        %v1680 = vand.u32 %v1423, 2147483648
        %v1681 = vor.u32 1.1754944e-38, %v1680
        %v1682 = vsel %vm1679, %v1681, %v1677
        %v1683 = vmul.f32 1.0, %v1682
        %v1684 = vrcp.pop %v1424
        %v1685 = vmul.f32 %v1424, %v1684
        %v1686 = vsub.f32 1.0, %v1685
        %v1687 = vmul.f32 %v1684, %v1686
        %v1688 = vadd.f32 %v1684, %v1687
        %vm1689 = vweird.f32 %v1424
        %vm1690 = vweird.f32 %v1684
        %vm1691 = vmor %vm1689, %vm1690
        %v1692 = vsel %vm1691, %v1684, %v1688
        %v1693 = vand.u32 2147483647, %v1424
        %vm1694 = vcmp.eq.f32.partialorder %v1693, 8.507059e+37
        %v1695 = vand.u32 %v1424, 2147483648
        %v1696 = vor.u32 1.1754944e-38, %v1695
        %v1697 = vsel %vm1694, %v1696, %v1692
        %v1698 = vmul.f32 1.0, %v1697
        %v1699 = vrcp.pop %v1425
        %v1700 = vmul.f32 %v1425, %v1699
        %v1701 = vsub.f32 1.0, %v1700
        %v1702 = vmul.f32 %v1699, %v1701
        %v1703 = vadd.f32 %v1699, %v1702
        %vm1704 = vweird.f32 %v1425
        %vm1705 = vweird.f32 %v1699
        %vm1706 = vmor %vm1704, %vm1705
        %v1707 = vsel %vm1706, %v1699, %v1703
        %v1708 = vand.u32 2147483647, %v1425
        %vm1709 = vcmp.eq.f32.partialorder %v1708, 8.507059e+37
        %v1710 = vand.u32 %v1425, 2147483648
        %v1711 = vor.u32 1.1754944e-38, %v1710
        %v1712 = vsel %vm1709, %v1711, %v1707
        %v1713 = vmul.f32 1.0, %v1712
        %v1714 = vrcp.pop %v1426
        %v1715 = vmul.f32 %v1426, %v1714
        %v1716 = vsub.f32 1.0, %v1715
        %v1717 = vmul.f32 %v1714, %v1716
        %v1718 = vadd.f32 %v1714, %v1717
        %vm1719 = vweird.f32 %v1426
        %vm1720 = vweird.f32 %v1714
        %vm1721 = vmor %vm1719, %vm1720
        %v1722 = vsel %vm1721, %v1714, %v1718
        %v1723 = vand.u32 2147483647, %v1426
        %vm1724 = vcmp.eq.f32.partialorder %v1723, 8.507059e+37
        %v1725 = vand.u32 %v1426, 2147483648
        %v1726 = vor.u32 1.1754944e-38, %v1725
        %v1727 = vsel %vm1724, %v1726, %v1722
        %v1728 = vmul.f32 1.0, %v1727
        %v1729 = vrcp.pop %v1427
        %v1730 = vmul.f32 %v1427, %v1729
        %v1731 = vsub.f32 1.0, %v1730
        %v1732 = vmul.f32 %v1729, %v1731
        %v1733 = vadd.f32 %v1729, %v1732
        %vm1734 = vweird.f32 %v1427
        %vm1735 = vweird.f32 %v1729
        %vm1736 = vmor %vm1734, %vm1735
        %v1737 = vsel %vm1736, %v1729, %v1733
        %v1738 = vand.u32 2147483647, %v1427
        %vm1739 = vcmp.eq.f32.partialorder %v1738, 8.507059e+37
        %v1740 = vand.u32 %v1427, 2147483648
        %v1741 = vor.u32 1.1754944e-38, %v1740
        %v1742 = vsel %vm1739, %v1741, %v1737
        %v1743 = vmul.f32 1.0, %v1742
        %v1744 = vrcp.pop %v1428
        %v1745 = vmul.f32 %v1428, %v1744
        %v1746 = vsub.f32 1.0, %v1745
        %v1747 = vmul.f32 %v1744, %v1746
        %v1748 = vadd.f32 %v1744, %v1747
        %vm1749 = vweird.f32 %v1428
        %vm1750 = vweird.f32 %v1744
        %vm1751 = vmor %vm1749, %vm1750
        %v1752 = vsel %vm1751, %v1744, %v1748
        %v1753 = vand.u32 2147483647, %v1428
        %vm1754 = vcmp.eq.f32.partialorder %v1753, 8.507059e+37
        %v1755 = vand.u32 %v1428, 2147483648
        %v1756 = vor.u32 1.1754944e-38, %v1755
        %v1757 = vsel %vm1754, %v1756, %v1752
        %v1758 = vmul.f32 1.0, %v1757
        %v1759 = vrcp.pop %v1429
        %v1760 = vmul.f32 %v1429, %v1759
        %v1761 = vsub.f32 1.0, %v1760
        %v1762 = vmul.f32 %v1759, %v1761
        %v1763 = vadd.f32 %v1759, %v1762
        %vm1764 = vweird.f32 %v1429
        %vm1765 = vweird.f32 %v1759
        %vm1766 = vmor %vm1764, %vm1765
        %v1767 = vsel %vm1766, %v1759, %v1763
        %v1768 = vand.u32 2147483647, %v1429
        %vm1769 = vcmp.eq.f32.partialorder %v1768, 8.507059e+37
        %v1770 = vand.u32 %v1429, 2147483648
        %v1771 = vor.u32 1.1754944e-38, %v1770
        %v1772 = vsel %vm1769, %v1771, %v1767
        %v1773 = vmul.f32 1.0, %v1772
        %v1774 = vrcp.pop %v1430
        %v1775 = vmul.f32 %v1430, %v1774
        %v1776 = vsub.f32 1.0, %v1775
        %v1777 = vmul.f32 %v1774, %v1776
        %v1778 = vadd.f32 %v1774, %v1777
        %vm1779 = vweird.f32 %v1430
        %vm1780 = vweird.f32 %v1774
        %vm1781 = vmor %vm1779, %vm1780
        %v1782 = vsel %vm1781, %v1774, %v1778
        %v1783 = vand.u32 2147483647, %v1430
        %vm1784 = vcmp.eq.f32.partialorder %v1783, 8.507059e+37
        %v1785 = vand.u32 %v1430, 2147483648
        %v1786 = vor.u32 1.1754944e-38, %v1785
        %v1787 = vsel %vm1784, %v1786, %v1782
        %v1788 = vmul.f32 1.0, %v1787
        %v1789 = vrcp.pop %v1431
        %v1790 = vmul.f32 %v1431, %v1789
        %v1791 = vsub.f32 1.0, %v1790
        %v1792 = vmul.f32 %v1789, %v1791
        %v1793 = vadd.f32 %v1789, %v1792
        %vm1794 = vweird.f32 %v1431
        %vm1795 = vweird.f32 %v1789
        %vm1796 = vmor %vm1794, %vm1795
        %v1797 = vsel %vm1796, %v1789, %v1793
        %v1798 = vand.u32 2147483647, %v1431
        %vm1799 = vcmp.eq.f32.partialorder %v1798, 8.507059e+37
        %v1800 = vand.u32 %v1431, 2147483648
        %v1801 = vor.u32 1.1754944e-38, %v1800
        %v1802 = vsel %vm1799, %v1801, %v1797
        %v1803 = vmul.f32 1.0, %v1802
        %v1804 = vrcp.pop %v1432
        %v1805 = vmul.f32 %v1432, %v1804
        %v1806 = vsub.f32 1.0, %v1805
        %v1807 = vmul.f32 %v1804, %v1806
        %v1808 = vadd.f32 %v1804, %v1807
        %vm1809 = vweird.f32 %v1432
        %vm1810 = vweird.f32 %v1804
        %vm1811 = vmor %vm1809, %vm1810
        %v1812 = vsel %vm1811, %v1804, %v1808
        %v1813 = vand.u32 2147483647, %v1432
        %vm1814 = vcmp.eq.f32.partialorder %v1813, 8.507059e+37
        %v1815 = vand.u32 %v1432, 2147483648
        %v1816 = vor.u32 1.1754944e-38, %v1815
        %v1817 = vsel %vm1814, %v1816, %v1812
        %v1818 = vmul.f32 1.0, %v1817
        %v1819 = vrcp.pop %v1433
        %v1820 = vmul.f32 %v1433, %v1819
        %v1821 = vsub.f32 1.0, %v1820
        %v1822 = vmul.f32 %v1819, %v1821
        %v1823 = vadd.f32 %v1819, %v1822
        %vm1824 = vweird.f32 %v1433
        %vm1825 = vweird.f32 %v1819
        %vm1826 = vmor %vm1824, %vm1825
        %v1827 = vsel %vm1826, %v1819, %v1823
        %v1828 = vand.u32 2147483647, %v1433
        %vm1829 = vcmp.eq.f32.partialorder %v1828, 8.507059e+37
        %v1830 = vand.u32 %v1433, 2147483648
        %v1831 = vor.u32 1.1754944e-38, %v1830
        %v1832 = vsel %vm1829, %v1831, %v1827
        %v1833 = vmul.f32 1.0, %v1832
        %v1834 = vrcp.pop %v1434
        %v1835 = vmul.f32 %v1434, %v1834
        %v1836 = vsub.f32 1.0, %v1835
        %v1837 = vmul.f32 %v1834, %v1836
        %v1838 = vadd.f32 %v1834, %v1837
        %vm1839 = vweird.f32 %v1434
        %vm1840 = vweird.f32 %v1834
        %vm1841 = vmor %vm1839, %vm1840
        %v1842 = vsel %vm1841, %v1834, %v1838
        %v1843 = vand.u32 2147483647, %v1434
        %vm1844 = vcmp.eq.f32.partialorder %v1843, 8.507059e+37
        %v1845 = vand.u32 %v1434, 2147483648
        %v1846 = vor.u32 1.1754944e-38, %v1845
        %v1847 = vsel %vm1844, %v1846, %v1842
        %v1848 = vmul.f32 1.0, %v1847
        %v1849 = vrcp.pop %v1435
        %v1850 = vmul.f32 %v1435, %v1849
        %v1851 = vsub.f32 1.0, %v1850
        %v1852 = vmul.f32 %v1849, %v1851
        %v1853 = vadd.f32 %v1849, %v1852
        %vm1854 = vweird.f32 %v1435
        %vm1855 = vweird.f32 %v1849
        %vm1856 = vmor %vm1854, %vm1855
        %v1857 = vsel %vm1856, %v1849, %v1853
        %v1858 = vand.u32 2147483647, %v1435
        %vm1859 = vcmp.eq.f32.partialorder %v1858, 8.507059e+37
        %v1860 = vand.u32 %v1435, 2147483648
        %v1861 = vor.u32 1.1754944e-38, %v1860
        %v1862 = vsel %vm1859, %v1861, %v1857
        %v1863 = vmul.f32 1.0, %v1862
        %v1864 = vrcp.pop %v1436
        %v1865 = vmul.f32 %v1436, %v1864
        %v1866 = vsub.f32 1.0, %v1865
        %v1867 = vmul.f32 %v1864, %v1866
        %v1868 = vadd.f32 %v1864, %v1867
        %vm1869 = vweird.f32 %v1436
        %vm1870 = vweird.f32 %v1864
        %vm1871 = vmor %vm1869, %vm1870
        %v1872 = vsel %vm1871, %v1864, %v1868
        %v1873 = vand.u32 2147483647, %v1436
        %vm1874 = vcmp.eq.f32.partialorder %v1873, 8.507059e+37
        %v1875 = vand.u32 %v1436, 2147483648
        %v1876 = vor.u32 1.1754944e-38, %v1875
        %v1877 = vsel %vm1874, %v1876, %v1872
        %v1878 = vmul.f32 1.0, %v1877
        %v1879 = vrcp.pop %v1437
        %v1880 = vmul.f32 %v1437, %v1879
        %v1881 = vsub.f32 1.0, %v1880
        %v1882 = vmul.f32 %v1879, %v1881
        %v1883 = vadd.f32 %v1879, %v1882
        %vm1884 = vweird.f32 %v1437
        %vm1885 = vweird.f32 %v1879
        %vm1886 = vmor %vm1884, %vm1885
        %v1887 = vsel %vm1886, %v1879, %v1883
        %v1888 = vand.u32 2147483647, %v1437
        %vm1889 = vcmp.eq.f32.partialorder %v1888, 8.507059e+37
        %v1890 = vand.u32 %v1437, 2147483648
        %v1891 = vor.u32 1.1754944e-38, %v1890
        %v1892 = vsel %vm1889, %v1891, %v1887
        %v1893 = vmul.f32 1.0, %v1892
        %v1894 = vrcp.pop %v1438
        %v1895 = vmul.f32 %v1438, %v1894
        %v1896 = vsub.f32 1.0, %v1895
        %v1897 = vmul.f32 %v1894, %v1896
        %v1898 = vadd.f32 %v1894, %v1897
        %vm1899 = vweird.f32 %v1438
        %vm1900 = vweird.f32 %v1894
        %vm1901 = vmor %vm1899, %vm1900
        %v1902 = vsel %vm1901, %v1894, %v1898
        %v1903 = vand.u32 2147483647, %v1438
        %vm1904 = vcmp.eq.f32.partialorder %v1903, 8.507059e+37
        %v1905 = vand.u32 %v1438, 2147483648
        %v1906 = vor.u32 1.1754944e-38, %v1905
        %v1907 = vsel %vm1904, %v1906, %v1902
        %v1908 = vmul.f32 1.0, %v1907
        %v1909 = vrcp.pop %v1439
        %v1910 = vmul.f32 %v1439, %v1909
        %v1911 = vsub.f32 1.0, %v1910
        %v1912 = vmul.f32 %v1909, %v1911
        %v1913 = vadd.f32 %v1909, %v1912
        %vm1914 = vweird.f32 %v1439
        %vm1915 = vweird.f32 %v1909
        %vm1916 = vmor %vm1914, %vm1915
        %v1917 = vsel %vm1916, %v1909, %v1913
        %v1918 = vand.u32 2147483647, %v1439
        %vm1919 = vcmp.eq.f32.partialorder %v1918, 8.507059e+37
        %v1920 = vand.u32 %v1439, 2147483648
        %v1921 = vor.u32 1.1754944e-38, %v1920
        %v1922 = vsel %vm1919, %v1921, %v1917
        %v1923 = vmul.f32 1.0, %v1922
        %v1924 = vrcp.pop %v1440
        %v1925 = vmul.f32 %v1440, %v1924
        %v1926 = vsub.f32 1.0, %v1925
        %v1927 = vmul.f32 %v1924, %v1926
        %v1928 = vadd.f32 %v1924, %v1927
        %vm1929 = vweird.f32 %v1440
        %vm1930 = vweird.f32 %v1924
        %vm1931 = vmor %vm1929, %vm1930
        %v1932 = vsel %vm1931, %v1924, %v1928
        %v1933 = vand.u32 2147483647, %v1440
        %vm1934 = vcmp.eq.f32.partialorder %v1933, 8.507059e+37
        %v1935 = vand.u32 %v1440, 2147483648
        %v1936 = vor.u32 1.1754944e-38, %v1935
        %v1937 = vsel %vm1934, %v1936, %v1932
        %v1938 = vmul.f32 1.0, %v1937
        %v1939 = vrcp.pop %v1441
        %v1940 = vmul.f32 %v1441, %v1939
        %v1941 = vsub.f32 1.0, %v1940
        %v1942 = vmul.f32 %v1939, %v1941
        %v1943 = vadd.f32 %v1939, %v1942
        %vm1944 = vweird.f32 %v1441
        %vm1945 = vweird.f32 %v1939
        %vm1946 = vmor %vm1944, %vm1945
        %v1947 = vsel %vm1946, %v1939, %v1943
        %v1948 = vand.u32 2147483647, %v1441
        %vm1949 = vcmp.eq.f32.partialorder %v1948, 8.507059e+37
        %v1950 = vand.u32 %v1441, 2147483648
        %v1951 = vor.u32 1.1754944e-38, %v1950
        %v1952 = vsel %vm1949, %v1951, %v1947
        %v1953 = vmul.f32 1.0, %v1952
        %v1954 = vrcp.pop %v1442
        %v1955 = vmul.f32 %v1442, %v1954
        %v1956 = vsub.f32 1.0, %v1955
        %v1957 = vmul.f32 %v1954, %v1956
        %v1958 = vadd.f32 %v1954, %v1957
        %vm1959 = vweird.f32 %v1442
        %vm1960 = vweird.f32 %v1954
        %vm1961 = vmor %vm1959, %vm1960
        %v1962 = vsel %vm1961, %v1954, %v1958
        %v1963 = vand.u32 2147483647, %v1442
        %vm1964 = vcmp.eq.f32.partialorder %v1963, 8.507059e+37
        %v1965 = vand.u32 %v1442, 2147483648
        %v1966 = vor.u32 1.1754944e-38, %v1965
        %v1967 = vsel %vm1964, %v1966, %v1962
        %v1968 = vmul.f32 1.0, %v1967
        %v1969 = vrcp.pop %v1443
        %v1970 = vmul.f32 %v1443, %v1969
        %v1971 = vsub.f32 1.0, %v1970
        %v1972 = vmul.f32 %v1969, %v1971
        %v1973 = vadd.f32 %v1969, %v1972
        %vm1974 = vweird.f32 %v1443
        %vm1975 = vweird.f32 %v1969
        %vm1976 = vmor %vm1974, %vm1975
        %v1977 = vsel %vm1976, %v1969, %v1973
        %v1978 = vand.u32 2147483647, %v1443
        %vm1979 = vcmp.eq.f32.partialorder %v1978, 8.507059e+37
        %v1980 = vand.u32 %v1443, 2147483648
        %v1981 = vor.u32 1.1754944e-38, %v1980
        %v1982 = vsel %vm1979, %v1981, %v1977
        %v1983 = vmul.f32 1.0, %v1982
        %v1984 = vrcp.pop %v1444
        %v1985 = vmul.f32 %v1444, %v1984
        %v1986 = vsub.f32 1.0, %v1985
        %v1987 = vmul.f32 %v1984, %v1986
        %v1988 = vadd.f32 %v1984, %v1987
        %vm1989 = vweird.f32 %v1444
        %vm1990 = vweird.f32 %v1984
        %vm1991 = vmor %vm1989, %vm1990
        %v1992 = vsel %vm1991, %v1984, %v1988
        %v1993 = vand.u32 2147483647, %v1444
        %vm1994 = vcmp.eq.f32.partialorder %v1993, 8.507059e+37
        %v1995 = vand.u32 %v1444, 2147483648
        %v1996 = vor.u32 1.1754944e-38, %v1995
        %v1997 = vsel %vm1994, %v1996, %v1992
        %v1998 = vmul.f32 1.0, %v1997
        %v1999 = vrcp.pop %v1445
        %v2000 = vmul.f32 %v1445, %v1999
        %v2001 = vsub.f32 1.0, %v2000
        %v2002 = vmul.f32 %v1999, %v2001
        %v2003 = vadd.f32 %v1999, %v2002
        %vm2004 = vweird.f32 %v1445
        %vm2005 = vweird.f32 %v1999
        %vm2006 = vmor %vm2004, %vm2005
        %v2007 = vsel %vm2006, %v1999, %v2003
        %v2008 = vand.u32 2147483647, %v1445
        %vm2009 = vcmp.eq.f32.partialorder %v2008, 8.507059e+37
        %v2010 = vand.u32 %v1445, 2147483648
        %v2011 = vor.u32 1.1754944e-38, %v2010
        %v2012 = vsel %vm2009, %v2011, %v2007
        %v2013 = vmul.f32 1.0, %v2012
        %v2014 = vrcp.pop %v1446
        %v2015 = vmul.f32 %v1446, %v2014
        %v2016 = vsub.f32 1.0, %v2015
        %v2017 = vmul.f32 %v2014, %v2016
        %v2018 = vadd.f32 %v2014, %v2017
        %vm2019 = vweird.f32 %v1446
        %vm2020 = vweird.f32 %v2014
        %vm2021 = vmor %vm2019, %vm2020
        %v2022 = vsel %vm2021, %v2014, %v2018
        %v2023 = vand.u32 2147483647, %v1446
        %vm2024 = vcmp.eq.f32.partialorder %v2023, 8.507059e+37
        %v2025 = vand.u32 %v1446, 2147483648
        %v2026 = vor.u32 1.1754944e-38, %v2025
        %v2027 = vsel %vm2024, %v2026, %v2022
        %v2028 = vmul.f32 1.0, %v2027
        %v2029 = vrcp.pop %v1447
        %v2030 = vmul.f32 %v1447, %v2029
        %v2031 = vsub.f32 1.0, %v2030
        %v2032 = vmul.f32 %v2029, %v2031
        %v2033 = vadd.f32 %v2029, %v2032
        %vm2034 = vweird.f32 %v1447
        %vm2035 = vweird.f32 %v2029
        %vm2036 = vmor %vm2034, %vm2035
        %v2037 = vsel %vm2036, %v2029, %v2033
        %v2038 = vand.u32 2147483647, %v1447
        %vm2039 = vcmp.eq.f32.partialorder %v2038, 8.507059e+37
        %v2040 = vand.u32 %v1447, 2147483648
        %v2041 = vor.u32 1.1754944e-38, %v2040
        %v2042 = vsel %vm2039, %v2041, %v2037
        %v2043 = vmul.f32 1.0, %v2042
        %v2044 = vrcp.pop %v1448
        %v2045 = vmul.f32 %v1448, %v2044
        %v2046 = vsub.f32 1.0, %v2045
        %v2047 = vmul.f32 %v2044, %v2046
        %v2048 = vadd.f32 %v2044, %v2047
        %vm2049 = vweird.f32 %v1448
        %vm2050 = vweird.f32 %v2044
        %vm2051 = vmor %vm2049, %vm2050
        %v2052 = vsel %vm2051, %v2044, %v2048
        %v2053 = vand.u32 2147483647, %v1448
        %vm2054 = vcmp.eq.f32.partialorder %v2053, 8.507059e+37
        %v2055 = vand.u32 %v1448, 2147483648
        %v2056 = vor.u32 1.1754944e-38, %v2055
        %v2057 = vsel %vm2054, %v2056, %v2052
        %v2058 = vmul.f32 1.0, %v2057
        %v2059 = vrcp.pop %v1449
        %v2060 = vmul.f32 %v1449, %v2059
        %v2061 = vsub.f32 1.0, %v2060
        %v2062 = vmul.f32 %v2059, %v2061
        %v2063 = vadd.f32 %v2059, %v2062
        %vm2064 = vweird.f32 %v1449
        %vm2065 = vweird.f32 %v2059
        %vm2066 = vmor %vm2064, %vm2065
        %v2067 = vsel %vm2066, %v2059, %v2063
        %v2068 = vand.u32 2147483647, %v1449
        %vm2069 = vcmp.eq.f32.partialorder %v2068, 8.507059e+37
        %v2070 = vand.u32 %v1449, 2147483648
        %v2071 = vor.u32 1.1754944e-38, %v2070
        %v2072 = vsel %vm2069, %v2071, %v2067
        %v2073 = vmul.f32 1.0, %v2072
        %v2074 = vrcp.pop %v1450
        %v2075 = vmul.f32 %v1450, %v2074
        %v2076 = vsub.f32 1.0, %v2075
        %v2077 = vmul.f32 %v2074, %v2076
        %v2078 = vadd.f32 %v2074, %v2077
        %vm2079 = vweird.f32 %v1450
        %vm2080 = vweird.f32 %v2074
        %vm2081 = vmor %vm2079, %vm2080
        %v2082 = vsel %vm2081, %v2074, %v2078
        %v2083 = vand.u32 2147483647, %v1450
        %vm2084 = vcmp.eq.f32.partialorder %v2083, 8.507059e+37
        %v2085 = vand.u32 %v1450, 2147483648
        %v2086 = vor.u32 1.1754944e-38, %v2085
        %v2087 = vsel %vm2084, %v2086, %v2082
        %v2088 = vmul.f32 1.0, %v2087
        %v2089 = vrcp.pop %v1451
        %v2090 = vmul.f32 %v1451, %v2089
        %v2091 = vsub.f32 1.0, %v2090
        %v2092 = vmul.f32 %v2089, %v2091
        %v2093 = vadd.f32 %v2089, %v2092
        %vm2094 = vweird.f32 %v1451
        %vm2095 = vweird.f32 %v2089
        %vm2096 = vmor %vm2094, %vm2095
        %v2097 = vsel %vm2096, %v2089, %v2093
        %v2098 = vand.u32 2147483647, %v1451
        %vm2099 = vcmp.eq.f32.partialorder %v2098, 8.507059e+37
        %v2100 = vand.u32 %v1451, 2147483648
        %v2101 = vor.u32 1.1754944e-38, %v2100
        %v2102 = vsel %vm2099, %v2101, %v2097
        %v2103 = vmul.f32 1.0, %v2102
        %v2104 = vrcp.pop %v1452
        %v2105 = vmul.f32 %v1452, %v2104
        %v2106 = vsub.f32 1.0, %v2105
        %v2107 = vmul.f32 %v2104, %v2106
        %v2108 = vadd.f32 %v2104, %v2107
        %vm2109 = vweird.f32 %v1452
        %vm2110 = vweird.f32 %v2104
        %vm2111 = vmor %vm2109, %vm2110
        %v2112 = vsel %vm2111, %v2104, %v2108
        %v2113 = vand.u32 2147483647, %v1452
        %vm2114 = vcmp.eq.f32.partialorder %v2113, 8.507059e+37
        %v2115 = vand.u32 %v1452, 2147483648
        %v2116 = vor.u32 1.1754944e-38, %v2115
        %v2117 = vsel %vm2114, %v2116, %v2112
        %v2118 = vmul.f32 1.0, %v2117
        %v2119 = vrcp.pop %v1453
        %v2120 = vmul.f32 %v1453, %v2119
        %v2121 = vsub.f32 1.0, %v2120
        %v2122 = vmul.f32 %v2119, %v2121
        %v2123 = vadd.f32 %v2119, %v2122
        %vm2124 = vweird.f32 %v1453
        %vm2125 = vweird.f32 %v2119
        %vm2126 = vmor %vm2124, %vm2125
        %v2127 = vsel %vm2126, %v2119, %v2123
        %v2128 = vand.u32 2147483647, %v1453
        %vm2129 = vcmp.eq.f32.partialorder %v2128, 8.507059e+37
        %v2130 = vand.u32 %v1453, 2147483648
        %v2131 = vor.u32 1.1754944e-38, %v2130
        %v2132 = vsel %vm2129, %v2131, %v2127
        %v2133 = vmul.f32 1.0, %v2132
        %v2134 = vrcp.pop %v1454
        %v2135 = vmul.f32 %v1454, %v2134
        %v2136 = vsub.f32 1.0, %v2135
        %v2137 = vmul.f32 %v2134, %v2136
        %v2138 = vadd.f32 %v2134, %v2137
        %vm2139 = vweird.f32 %v1454
        %vm2140 = vweird.f32 %v2134
        %vm2141 = vmor %vm2139, %vm2140
        %v2142 = vsel %vm2141, %v2134, %v2138
        %v2143 = vand.u32 2147483647, %v1454
        %vm2144 = vcmp.eq.f32.partialorder %v2143, 8.507059e+37
        %v2145 = vand.u32 %v1454, 2147483648
        %v2146 = vor.u32 1.1754944e-38, %v2145
        %v2147 = vsel %vm2144, %v2146, %v2142
        %v2148 = vmul.f32 1.0, %v2147
        %v2149 = vrcp.pop %v1455
        %v2150 = vmul.f32 %v1455, %v2149
        %v2151 = vsub.f32 1.0, %v2150
        %v2152 = vmul.f32 %v2149, %v2151
        %v2153 = vadd.f32 %v2149, %v2152
        %vm2154 = vweird.f32 %v1455
        %vm2155 = vweird.f32 %v2149
        %vm2156 = vmor %vm2154, %vm2155
        %v2157 = vsel %vm2156, %v2149, %v2153
        %v2158 = vand.u32 2147483647, %v1455
        %vm2159 = vcmp.eq.f32.partialorder %v2158, 8.507059e+37
        %v2160 = vand.u32 %v1455, 2147483648
        %v2161 = vor.u32 1.1754944e-38, %v2160
        %v2162 = vsel %vm2159, %v2161, %v2157
        %v2163 = vmul.f32 1.0, %v2162
        %v2164 = vrcp.pop %v1456
        %v2165 = vmul.f32 %v1456, %v2164
        %v2166 = vsub.f32 1.0, %v2165
        %v2167 = vmul.f32 %v2164, %v2166
        %v2168 = vadd.f32 %v2164, %v2167
        %vm2169 = vweird.f32 %v1456
        %vm2170 = vweird.f32 %v2164
        %vm2171 = vmor %vm2169, %vm2170
        %v2172 = vsel %vm2171, %v2164, %v2168
        %v2173 = vand.u32 2147483647, %v1456
        %vm2174 = vcmp.eq.f32.partialorder %v2173, 8.507059e+37
        %v2175 = vand.u32 %v1456, 2147483648
        %v2176 = vor.u32 1.1754944e-38, %v2175
        %v2177 = vsel %vm2174, %v2176, %v2172
        %v2178 = vmul.f32 1.0, %v2177
        %v2179 = vrcp.pop %v1457
        %v2180 = vmul.f32 %v1457, %v2179
        %v2181 = vsub.f32 1.0, %v2180
        %v2182 = vmul.f32 %v2179, %v2181
        %v2183 = vadd.f32 %v2179, %v2182
        %vm2184 = vweird.f32 %v1457
        %vm2185 = vweird.f32 %v2179
        %vm2186 = vmor %vm2184, %vm2185
        %v2187 = vsel %vm2186, %v2179, %v2183
        %v2188 = vand.u32 2147483647, %v1457
        %vm2189 = vcmp.eq.f32.partialorder %v2188, 8.507059e+37
        %v2190 = vand.u32 %v1457, 2147483648
        %v2191 = vor.u32 1.1754944e-38, %v2190
        %v2192 = vsel %vm2189, %v2191, %v2187
        %v2193 = vmul.f32 1.0, %v2192
        %v2194 = vrcp.pop %v1458
        %v2195 = vmul.f32 %v1458, %v2194
        %v2196 = vsub.f32 1.0, %v2195
        %v2197 = vmul.f32 %v2194, %v2196
        %v2198 = vadd.f32 %v2194, %v2197
        %vm2199 = vweird.f32 %v1458
        %vm2200 = vweird.f32 %v2194
        %vm2201 = vmor %vm2199, %vm2200
        %v2202 = vsel %vm2201, %v2194, %v2198
        %v2203 = vand.u32 2147483647, %v1458
        %vm2204 = vcmp.eq.f32.partialorder %v2203, 8.507059e+37
        %v2205 = vand.u32 %v1458, 2147483648
        %v2206 = vor.u32 1.1754944e-38, %v2205
        %v2207 = vsel %vm2204, %v2206, %v2202
        %v2208 = vmul.f32 1.0, %v2207
        %v2209 = vrcp.pop %v1459
        %v2210 = vmul.f32 %v1459, %v2209
        %v2211 = vsub.f32 1.0, %v2210
        %v2212 = vmul.f32 %v2209, %v2211
        %v2213 = vadd.f32 %v2209, %v2212
        %vm2214 = vweird.f32 %v1459
        %vm2215 = vweird.f32 %v2209
        %vm2216 = vmor %vm2214, %vm2215
        %v2217 = vsel %vm2216, %v2209, %v2213
        %v2218 = vand.u32 2147483647, %v1459
        %vm2219 = vcmp.eq.f32.partialorder %v2218, 8.507059e+37
        %v2220 = vand.u32 %v1459, 2147483648
        %v2221 = vor.u32 1.1754944e-38, %v2220
        %v2222 = vsel %vm2219, %v2221, %v2217
        %v2223 = vmul.f32 1.0, %v2222
        %v2224 = vrcp.pop %v1460
        %v2225 = vmul.f32 %v1460, %v2224
        %v2226 = vsub.f32 1.0, %v2225
        %v2227 = vmul.f32 %v2224, %v2226
        %v2228 = vadd.f32 %v2224, %v2227
        %vm2229 = vweird.f32 %v1460
        %vm2230 = vweird.f32 %v2224
        %vm2231 = vmor %vm2229, %vm2230
        %v2232 = vsel %vm2231, %v2224, %v2228
        %v2233 = vand.u32 2147483647, %v1460
        %vm2234 = vcmp.eq.f32.partialorder %v2233, 8.507059e+37
        %v2235 = vand.u32 %v1460, 2147483648
        %v2236 = vor.u32 1.1754944e-38, %v2235
        %v2237 = vsel %vm2234, %v2236, %v2232
        %v2238 = vmul.f32 1.0, %v2237
        %v2239 = vrcp.pop %v1461
        %v2240 = vmul.f32 %v1461, %v2239
        %v2241 = vsub.f32 1.0, %v2240
        %v2242 = vmul.f32 %v2239, %v2241
        %v2243 = vadd.f32 %v2239, %v2242
        %vm2244 = vweird.f32 %v1461
        %vm2245 = vweird.f32 %v2239
        %vm2246 = vmor %vm2244, %vm2245
        %v2247 = vsel %vm2246, %v2239, %v2243
        %v2248 = vand.u32 2147483647, %v1461
        %vm2249 = vcmp.eq.f32.partialorder %v2248, 8.507059e+37
        %v2250 = vand.u32 %v1461, 2147483648
        %v2251 = vor.u32 1.1754944e-38, %v2250
        %v2252 = vsel %vm2249, %v2251, %v2247
        %v2253 = vmul.f32 1.0, %v2252
        %v2254 = vrcp.pop %v1462
        %v2255 = vmul.f32 %v1462, %v2254
        %v2256 = vsub.f32 1.0, %v2255
        %v2257 = vmul.f32 %v2254, %v2256
        %v2258 = vadd.f32 %v2254, %v2257
        %vm2259 = vweird.f32 %v1462
        %vm2260 = vweird.f32 %v2254
        %vm2261 = vmor %vm2259, %vm2260
        %v2262 = vsel %vm2261, %v2254, %v2258
        %v2263 = vand.u32 2147483647, %v1462
        %vm2264 = vcmp.eq.f32.partialorder %v2263, 8.507059e+37
        %v2265 = vand.u32 %v1462, 2147483648
        %v2266 = vor.u32 1.1754944e-38, %v2265
        %v2267 = vsel %vm2264, %v2266, %v2262
        %v2268 = vmul.f32 1.0, %v2267
        %v2269 = vrcp.pop %v1463
        %v2270 = vmul.f32 %v1463, %v2269
        %v2271 = vsub.f32 1.0, %v2270
        %v2272 = vmul.f32 %v2269, %v2271
        %v2273 = vadd.f32 %v2269, %v2272
        %vm2274 = vweird.f32 %v1463
        %vm2275 = vweird.f32 %v2269
        %vm2276 = vmor %vm2274, %vm2275
        %v2277 = vsel %vm2276, %v2269, %v2273
        %v2278 = vand.u32 2147483647, %v1463
        %vm2279 = vcmp.eq.f32.partialorder %v2278, 8.507059e+37
        %v2280 = vand.u32 %v1463, 2147483648
        %v2281 = vor.u32 1.1754944e-38, %v2280
        %v2282 = vsel %vm2279, %v2281, %v2277
        %v2283 = vmul.f32 1.0, %v2282
        %v2284 = vrcp.pop %v1464
        %v2285 = vmul.f32 %v1464, %v2284
        %v2286 = vsub.f32 1.0, %v2285
        %v2287 = vmul.f32 %v2284, %v2286
        %v2288 = vadd.f32 %v2284, %v2287
        %vm2289 = vweird.f32 %v1464
        %vm2290 = vweird.f32 %v2284
        %vm2291 = vmor %vm2289, %vm2290
        %v2292 = vsel %vm2291, %v2284, %v2288
        %v2293 = vand.u32 2147483647, %v1464
        %vm2294 = vcmp.eq.f32.partialorder %v2293, 8.507059e+37
        %v2295 = vand.u32 %v1464, 2147483648
        %v2296 = vor.u32 1.1754944e-38, %v2295
        %v2297 = vsel %vm2294, %v2296, %v2292
        %v2298 = vmul.f32 1.0, %v2297
        %v2299 = vrcp.pop %v1465
        %v2300 = vmul.f32 %v1465, %v2299
        %v2301 = vsub.f32 1.0, %v2300
        %v2302 = vmul.f32 %v2299, %v2301
        %v2303 = vadd.f32 %v2299, %v2302
        %vm2304 = vweird.f32 %v1465
        %vm2305 = vweird.f32 %v2299
        %vm2306 = vmor %vm2304, %vm2305
        %v2307 = vsel %vm2306, %v2299, %v2303
        %v2308 = vand.u32 2147483647, %v1465
        %vm2309 = vcmp.eq.f32.partialorder %v2308, 8.507059e+37
        %v2310 = vand.u32 %v1465, 2147483648
        %v2311 = vor.u32 1.1754944e-38, %v2310
        %v2312 = vsel %vm2309, %v2311, %v2307
        %v2313 = vmul.f32 1.0, %v2312
        %v2314 = vrcp.pop %v1466
        %v2315 = vmul.f32 %v1466, %v2314
        %v2316 = vsub.f32 1.0, %v2315
        %v2317 = vmul.f32 %v2314, %v2316
        %v2318 = vadd.f32 %v2314, %v2317
        %vm2319 = vweird.f32 %v1466
        %vm2320 = vweird.f32 %v2314
        %vm2321 = vmor %vm2319, %vm2320
        %v2322 = vsel %vm2321, %v2314, %v2318
        %v2323 = vand.u32 2147483647, %v1466
        %vm2324 = vcmp.eq.f32.partialorder %v2323, 8.507059e+37
        %v2325 = vand.u32 %v1466, 2147483648
        %v2326 = vor.u32 1.1754944e-38, %v2325
        %v2327 = vsel %vm2324, %v2326, %v2322
        %v2328 = vmul.f32 1.0, %v2327
        %v2329 = vrcp.pop %v1467
        %v2330 = vmul.f32 %v1467, %v2329
        %v2331 = vsub.f32 1.0, %v2330
        %v2332 = vmul.f32 %v2329, %v2331
        %v2333 = vadd.f32 %v2329, %v2332
        %vm2334 = vweird.f32 %v1467
        %vm2335 = vweird.f32 %v2329
        %vm2336 = vmor %vm2334, %vm2335
        %v2337 = vsel %vm2336, %v2329, %v2333
        %v2338 = vand.u32 2147483647, %v1467
        %vm2339 = vcmp.eq.f32.partialorder %v2338, 8.507059e+37
        %v2340 = vand.u32 %v1467, 2147483648
        %v2341 = vor.u32 1.1754944e-38, %v2340
        %v2342 = vsel %vm2339, %v2341, %v2337
        %v2343 = vmul.f32 1.0, %v2342
        %v2344 = vrcp.pop %v1468
        %v2345 = vmul.f32 %v1468, %v2344
        %v2346 = vsub.f32 1.0, %v2345
        %v2347 = vmul.f32 %v2344, %v2346
        %v2348 = vadd.f32 %v2344, %v2347
        %vm2349 = vweird.f32 %v1468
        %vm2350 = vweird.f32 %v2344
        %vm2351 = vmor %vm2349, %vm2350
        %v2352 = vsel %vm2351, %v2344, %v2348
        %v2353 = vand.u32 2147483647, %v1468
        %vm2354 = vcmp.eq.f32.partialorder %v2353, 8.507059e+37
        %v2355 = vand.u32 %v1468, 2147483648
        %v2356 = vor.u32 1.1754944e-38, %v2355
        %v2357 = vsel %vm2354, %v2356, %v2352
        %v2358 = vmul.f32 1.0, %v2357
        %v2359 = vrcp.pop %v1469
        %v2360 = vmul.f32 %v1469, %v2359
        %v2361 = vsub.f32 1.0, %v2360
        %v2362 = vmul.f32 %v2359, %v2361
        %v2363 = vadd.f32 %v2359, %v2362
        %vm2364 = vweird.f32 %v1469
        %vm2365 = vweird.f32 %v2359
        %vm2366 = vmor %vm2364, %vm2365
        %v2367 = vsel %vm2366, %v2359, %v2363
        %v2368 = vand.u32 2147483647, %v1469
        %vm2369 = vcmp.eq.f32.partialorder %v2368, 8.507059e+37
        %v2370 = vand.u32 %v1469, 2147483648
        %v2371 = vor.u32 1.1754944e-38, %v2370
        %v2372 = vsel %vm2369, %v2371, %v2367
        %v2373 = vmul.f32 1.0, %v2372
        %v2374 = vrcp.pop %v1470
        %v2375 = vmul.f32 %v1470, %v2374
        %v2376 = vsub.f32 1.0, %v2375
        %v2377 = vmul.f32 %v2374, %v2376
        %v2378 = vadd.f32 %v2374, %v2377
        %vm2379 = vweird.f32 %v1470
        %vm2380 = vweird.f32 %v2374
        %vm2381 = vmor %vm2379, %vm2380
        %v2382 = vsel %vm2381, %v2374, %v2378
        %v2383 = vand.u32 2147483647, %v1470
        %vm2384 = vcmp.eq.f32.partialorder %v2383, 8.507059e+37
        %v2385 = vand.u32 %v1470, 2147483648
        %v2386 = vor.u32 1.1754944e-38, %v2385
        %v2387 = vsel %vm2384, %v2386, %v2382
        %v2388 = vmul.f32 1.0, %v2387
        %v2389 = vrcp.pop %v1471
        %v2390 = vmul.f32 %v1471, %v2389
        %v2391 = vsub.f32 1.0, %v2390
        %v2392 = vmul.f32 %v2389, %v2391
        %v2393 = vadd.f32 %v2389, %v2392
        %vm2394 = vweird.f32 %v1471
        %vm2395 = vweird.f32 %v2389
        %vm2396 = vmor %vm2394, %vm2395
        %v2397 = vsel %vm2396, %v2389, %v2393
        %v2398 = vand.u32 2147483647, %v1471
        %vm2399 = vcmp.eq.f32.partialorder %v2398, 8.507059e+37
        %v2400 = vand.u32 %v1471, 2147483648
        %v2401 = vor.u32 1.1754944e-38, %v2400
        %v2402 = vsel %vm2399, %v2401, %v2397
        %v2403 = vmul.f32 1.0, %v2402
        %v2404 = vrcp.pop %v1472
        %v2405 = vmul.f32 %v1472, %v2404
        %v2406 = vsub.f32 1.0, %v2405
        %v2407 = vmul.f32 %v2404, %v2406
        %v2408 = vadd.f32 %v2404, %v2407
        %vm2409 = vweird.f32 %v1472
        %vm2410 = vweird.f32 %v2404
        %vm2411 = vmor %vm2409, %vm2410
        %v2412 = vsel %vm2411, %v2404, %v2408
        %v2413 = vand.u32 2147483647, %v1472
        %vm2414 = vcmp.eq.f32.partialorder %v2413, 8.507059e+37
        %v2415 = vand.u32 %v1472, 2147483648
        %v2416 = vor.u32 1.1754944e-38, %v2415
        %v2417 = vsel %vm2414, %v2416, %v2412
        %v2418 = vmul.f32 1.0, %v2417
        %v2419 = vrcp.pop %v1473
        %v2420 = vmul.f32 %v1473, %v2419
        %v2421 = vsub.f32 1.0, %v2420
        %v2422 = vmul.f32 %v2419, %v2421
        %v2423 = vadd.f32 %v2419, %v2422
        %vm2424 = vweird.f32 %v1473
        %vm2425 = vweird.f32 %v2419
        %vm2426 = vmor %vm2424, %vm2425
        %v2427 = vsel %vm2426, %v2419, %v2423
        %v2428 = vand.u32 2147483647, %v1473
        %vm2429 = vcmp.eq.f32.partialorder %v2428, 8.507059e+37
        %v2430 = vand.u32 %v1473, 2147483648
        %v2431 = vor.u32 1.1754944e-38, %v2430
        %v2432 = vsel %vm2429, %v2431, %v2427
        %v2433 = vmul.f32 1.0, %v2432
        %vm2434 = vcmask 7168
        %2435 = vst.msk [vmem:[%s249] sm:$0xff] %vm2434, %v1488
        %2436 = vst.msk [vmem:[%s249 + $0x8] sm:$0xff] %vm2434, %v1503
        %2437 = vst.msk [vmem:[%s249 + $0x10] sm:$0xff] %vm2434, %v1518
        %2438 = vst.msk [vmem:[%s249 + $0x18] sm:$0xff] %vm2434, %v1533
        %2439 = vst.msk [vmem:[%s249 + $0x20] sm:$0xff] %vm2434, %v1548
        %2440 = vst.msk [vmem:[%s249 + $0x28] sm:$0xff] %vm2434, %v1563
        %2441 = vst.msk [vmem:[%s249 + $0x30] sm:$0xff] %vm2434, %v1578
        %2442 = vst.msk [vmem:[%s249 + $0x38] sm:$0xff] %vm2434, %v1593
        %2443 = vst.msk [vmem:[%s249 + $0x40] sm:$0xff] %vm2434, %v1608
        %2444 = vst.msk [vmem:[%s249 + $0x48] sm:$0xff] %vm2434, %v1623
        %2445 = vst.msk [vmem:[%s249 + $0x50] sm:$0xff] %vm2434, %v1638
        %2446 = vst.msk [vmem:[%s249 + $0x58] sm:$0xff] %vm2434, %v1653
        %2447 = vst.msk [vmem:[%s249 + $0x60] sm:$0xff] %vm2434, %v1668
        %2448 = vst.msk [vmem:[%s249 + $0x68] sm:$0xff] %vm2434, %v1683
        %2449 = vst.msk [vmem:[%s249 + $0x70] sm:$0xff] %vm2434, %v1698
        %2450 = vst.msk [vmem:[%s249 + $0x78] sm:$0xff] %vm2434, %v1713
        %2451 = vst.msk [vmem:[%s249 + $0x80] sm:$0xff] %vm2434, %v1728
        %2452 = vst.msk [vmem:[%s249 + $0x88] sm:$0xff] %vm2434, %v1743
        %2453 = vst.msk [vmem:[%s249 + $0x90] sm:$0xff] %vm2434, %v1758
        %2454 = vst.msk [vmem:[%s249 + $0x98] sm:$0xff] %vm2434, %v1773
        %2455 = vst.msk [vmem:[%s249 + $0xa0] sm:$0xff] %vm2434, %v1788
        %2456 = vst.msk [vmem:[%s249 + $0xa8] sm:$0xff] %vm2434, %v1803
        %2457 = vst.msk [vmem:[%s249 + $0xb0] sm:$0xff] %vm2434, %v1818
        %2458 = vst.msk [vmem:[%s249 + $0xb8] sm:$0xff] %vm2434, %v1833
        %2459 = vst.msk [vmem:[%s249 + $0xc0] sm:$0xff] %vm2434, %v1848
        %2460 = vst.msk [vmem:[%s249 + $0xc8] sm:$0xff] %vm2434, %v1863
        %2461 = vst.msk [vmem:[%s249 + $0xd0] sm:$0xff] %vm2434, %v1878
        %2462 = vst.msk [vmem:[%s249 + $0xd8] sm:$0xff] %vm2434, %v1893
        %2463 = vst.msk [vmem:[%s249 + $0xe0] sm:$0xff] %vm2434, %v1908
        %2464 = vst.msk [vmem:[%s249 + $0xe8] sm:$0xff] %vm2434, %v1923
        %2465 = vst.msk [vmem:[%s249 + $0xf0] sm:$0xff] %vm2434, %v1938
        %2466 = vst.msk [vmem:[%s249 + $0xf8] sm:$0xff] %vm2434, %v1953
        %2467 = vst.msk [vmem:[%s249 + $0x100] sm:$0xff] %vm2434, %v1968
        %2468 = vst.msk [vmem:[%s249 + $0x108] sm:$0xff] %vm2434, %v1983
        %2469 = vst.msk [vmem:[%s249 + $0x110] sm:$0xff] %vm2434, %v1998
        %2470 = vst.msk [vmem:[%s249 + $0x118] sm:$0xff] %vm2434, %v2013
        %2471 = vst.msk [vmem:[%s249 + $0x120] sm:$0xff] %vm2434, %v2028
        %2472 = vst.msk [vmem:[%s249 + $0x128] sm:$0xff] %vm2434, %v2043
        %2473 = vst.msk [vmem:[%s249 + $0x130] sm:$0xff] %vm2434, %v2058
        %2474 = vst.msk [vmem:[%s249 + $0x138] sm:$0xff] %vm2434, %v2073
        %2475 = vst.msk [vmem:[%s249 + $0x140] sm:$0xff] %vm2434, %v2088
        %2476 = vst.msk [vmem:[%s249 + $0x148] sm:$0xff] %vm2434, %v2103
        %2477 = vst.msk [vmem:[%s249 + $0x150] sm:$0xff] %vm2434, %v2118
        %2478 = vst.msk [vmem:[%s249 + $0x158] sm:$0xff] %vm2434, %v2133
        %2479 = vst.msk [vmem:[%s249 + $0x160] sm:$0xff] %vm2434, %v2148
        %2480 = vst.msk [vmem:[%s249 + $0x168] sm:$0xff] %vm2434, %v2163
        %2481 = vst.msk [vmem:[%s249 + $0x170] sm:$0xff] %vm2434, %v2178
        %2482 = vst.msk [vmem:[%s249 + $0x178] sm:$0xff] %vm2434, %v2193
        %2483 = vst.msk [vmem:[%s249 + $0x180] sm:$0xff] %vm2434, %v2208
        %2484 = vst.msk [vmem:[%s249 + $0x188] sm:$0xff] %vm2434, %v2223
        %2485 = vst.msk [vmem:[%s249 + $0x190] sm:$0xff] %vm2434, %v2238
        %2486 = vst.msk [vmem:[%s249 + $0x198] sm:$0xff] %vm2434, %v2253
        %2487 = vst.msk [vmem:[%s249 + $0x1a0] sm:$0xff] %vm2434, %v2268
        %2488 = vst.msk [vmem:[%s249 + $0x1a8] sm:$0xff] %vm2434, %v2283
        %2489 = vst.msk [vmem:[%s249 + $0x1b0] sm:$0xff] %vm2434, %v2298
        %2490 = vst.msk [vmem:[%s249 + $0x1b8] sm:$0xff] %vm2434, %v2313
        %2491 = vst.msk [vmem:[%s249 + $0x1c0] sm:$0xff] %vm2434, %v2328
        %2492 = vst.msk [vmem:[%s249 + $0x1c8] sm:$0xff] %vm2434, %v2343
        %2493 = vst.msk [vmem:[%s249 + $0x1d0] sm:$0xff] %vm2434, %v2358
        %2494 = vst.msk [vmem:[%s249 + $0x1d8] sm:$0xff] %vm2434, %v2373
        %2495 = vst.msk [vmem:[%s249 + $0x1e0] sm:$0xff] %vm2434, %v2388
        %2496 = vst.msk [vmem:[%s249 + $0x1e8] sm:$0xff] %vm2434, %v2403
        %2497 = vst.msk [vmem:[%s249 + $0x1f0] sm:$0xff] %vm2434, %v2418
        %2498 = vst.msk [vmem:[%s249 + $0x1f8] sm:$0xff] %vm2434, %v2433
        %s2499 = smul.u32 64, %s21
        %p2500 = scmp.lt.s32.totalorder %s2499, 127
        %s2501 = scalar_select %p2500, %s2499, 127
        %s2502 = smul.addr %s2501, 8
        %s2503 = scalar_lea.vmem %s5, %s2502
        // Predicated region
        $region45: #{tpu_custom_call.1} parent=39 // pred_check
          %p2504 = pneg %p149
        $region46: #{tpu_custom_call.1} parent=39 // pred_check_branch
          %2506 = sbr.rel (%p2504) target = $region48
        $region47: #{tpu_custom_call.1} parent=39 // pred_region
          %s2507 = smul.u32 64, %s21
        $region48: #{tpu_custom_call.1} parent=39 // pred_fallthru
          _
      $region40: #{tpu_custom_call.1} parent=5 // pred_fallthru
        _
      %p2508 = scmp.le.s32.totalorder 2, %s16
      // Predicated region
      $region49: #{tpu_custom_call.1} parent=5 // pred_check
        %p2509 = pneg %p2508
      $region50: #{tpu_custom_call.1} parent=5 // pred_check_branch
        %2511 = sbr.rel (%p2509) target = $region52
      $region51: #{tpu_custom_call.1} parent=5 // pred_region
        %s2512 = ssub.s32 %s16, 2
        // Predicated region
        $region53: #{tpu_custom_call.1} parent=51 // pred_check
          %p2513 = pneg %p155
        $region54: #{tpu_custom_call.1} parent=51 // pred_check_branch
          %2515 = sbr.rel (%p2513) target = $region56
        $region55: #{tpu_custom_call.1} parent=51 // pred_region
          %s2516 = smul.u32 64, %s22
          %p2517 = scmp.lt.s32.totalorder %s2516, 127
          %s2518 = scalar_select %p2517, %s2516, 127
          %s2519 = smul.addr %s2518, 8
          %s2520 = scalar_lea.vmem %s5, %s2519
        $region56: #{tpu_custom_call.1} parent=51 // pred_fallthru
          _
      $region52: #{tpu_custom_call.1} parent=5 // pred_fallthru
        _
    $region6: #{tpu_custom_call.1} parent=1 // loop_footer
      %s20 = sadd.s32 1, %s16
    $region7: #{tpu_custom_call.1} parent=1 // loop_footer_branch
      %15 = sbr.rel target = $region3
    $region8: #{tpu_custom_call.1} parent=1 // loop_exit
      _
    %2521 = vsyncpa [#allocation4], 1
    %s2522 = scalar_lea.sflag [#allocation4], 1
    %2523 = vsyncpa %s2522, 1

</llo_original>
